<compile_context>
chip_gen: v7x
topology: tpu7x:2x2x1
jax: 0.10.0
libtpu: 0.0.40
codegen_flags: <defaults>
</compile_context>

<pallas_src>
import functools

import numpy as np
import jax
import jax.numpy as jnp
from jax.experimental import pallas as pl
from jax.experimental.pallas import tpu as pltpu

F32 = jnp.float32
BF16 = jnp.bfloat16
W_SCALE = 0.05
BN_SCALE = float(1.0 / np.sqrt(1.0 + 1e-5))   # running var=1, gamma=1, beta=0


def _round_up(x, m):
    return (x + m - 1) // m * m


# --------------------------------------------------------------------------
# Pallas matmul kernel with fused affine / residual / activation epilogue
# --------------------------------------------------------------------------
def _apply_act(y, act):
    if act == "lrelu":
        return jnp.where(y >= 0, y, 0.1 * y)
    if act == "sigmoid":
        return jax.nn.sigmoid(y)
    return y


def _mm_kernel(*refs, act, nk, has_res):
    if has_res:
        a_ref, b_ref, s_ref, t_ref, r_ref, o_ref = refs[:6]
        rest = refs[6:]
    else:
        a_ref, b_ref, s_ref, t_ref, o_ref = refs[:5]
        r_ref = None
        rest = refs[5:]

    if nk == 1:
        y = jnp.dot(a_ref[...], b_ref[...], preferred_element_type=jnp.float32)
        y = y * s_ref[...] + t_ref[...]
        if has_res:
            y = y + r_ref[...]
        o_ref[...] = _apply_act(y, act).astype(o_ref.dtype)
    else:
        acc_ref = rest[0]

        @pl.when(pl.program_id(2) == 0)
        def _():
            acc_ref[...] = jnp.zeros_like(acc_ref)

        acc_ref[...] += jnp.dot(a_ref[...], b_ref[...],
                                preferred_element_type=jnp.float32)

        @pl.when(pl.program_id(2) == pl.num_programs(2) - 1)
        def _():
            y = acc_ref[...] * s_ref[...] + t_ref[...]
            if has_res:
                y = y + r_ref[...]
            o_ref[...] = _apply_act(y, act).astype(o_ref.dtype)


def _pick_m(m):
    if m % 512 == 0:
        return 512, m
    if m <= 1024:
        return m, m
    for t in range(512, 7, -8):
        if m % t == 0:
            return t, m
    return 512, _round_up(m, 512)


def _pick_n(n):
    if n <= 512:
        return n, n
    for t in (512, 256, 128):
        if n % t == 0:
            return t, n
    return 128, _round_up(n, 128)


def _pick_k(k):
    if k <= 2048:
        return k, k
    for t in (2048, 1024, 512, 256, 128):
        if k % t == 0:
            return t, k
    return 512, _round_up(k, 512)


def _pad_dim(x, axis, new):
    pad = [(0, 0)] * x.ndim
    pad[axis] = (0, new - x.shape[axis])
    return jnp.pad(x, pad)


def matmul_affine(a, b, scale, shift, act="none", residual=None,
                  out_dtype=jnp.float32):
    """act((a @ b) * scale + shift [+ residual]) on the MXU (bf16 in, f32 acc)."""
    M, K = a.shape
    K2, N = b.shape
    assert K == K2, (a.shape, b.shape)
    Morig, Norig = M, N

    a = a.astype(BF16)
    b = b.astype(BF16)
    scale = jnp.asarray(scale, F32).reshape(1, N)
    shift = jnp.asarray(shift, F32).reshape(1, N)
    if residual is not None:
        residual = residual.astype(F32)

    # tiny-dim guards (keeps the MXU lowering on well-trodden shapes)
    if M < 8:
        a = _pad_dim(a, 0, 8)
        if residual is not None:
            residual = _pad_dim(residual, 0, 8)
        M = 8
    if K < 8:
        a = _pad_dim(a, 1, 8)
        b = _pad_dim(b, 0, 8)
        K = 8
    if N < 8:
        b = _pad_dim(b, 1, 8)
        scale = _pad_dim(scale, 1, 8)
        shift = _pad_dim(shift, 1, 8)
        if residual is not None:
            residual = _pad_dim(residual, 1, 8)
        N = 8

    tm, Mp = _pick_m(M)
    tn, Np = _pick_n(N)
    tk, Kp = _pick_k(K)
    if Mp != M:
        a = _pad_dim(a, 0, Mp)
        if residual is not None:
            residual = _pad_dim(residual, 0, Mp)
    if Kp != K:
        a = _pad_dim(a, 1, Kp)
        b = _pad_dim(b, 0, Kp)
    if Np != N:
        b = _pad_dim(b, 1, Np)
        scale = _pad_dim(scale, 1, Np)
        shift = _pad_dim(shift, 1, Np)
        if residual is not None:
            residual = _pad_dim(residual, 1, Np)

    nk = Kp // tk
    has_res = residual is not None

    in_specs = [
        pl.BlockSpec((tm, tk), lambda i, j, k: (i, k)),
        pl.BlockSpec((tk, tn), lambda i, j, k: (k, j)),
        pl.BlockSpec((1, tn), lambda i, j, k: (0, j)),
        pl.BlockSpec((1, tn), lambda i, j, k: (0, j)),
    ]
    inputs = [a, b, scale, shift]
    if has_res:
        in_specs.append(pl.BlockSpec((tm, tn), lambda i, j, k: (i, j)))
        inputs.append(residual)
    scratch = [] if nk == 1 else [pltpu.VMEM((tm, tn), jnp.float32)]

    out = pl.pallas_call(
        functools.partial(_mm_kernel, act=act, nk=nk, has_res=has_res),
        out_shape=jax.ShapeDtypeStruct((Mp, Np), out_dtype),
        grid_spec=pltpu.PrefetchScalarGridSpec(
            num_scalar_prefetch=0,
            grid=(Mp // tm, Np // tn, nk),
            in_specs=in_specs,
            out_specs=pl.BlockSpec((tm, tn), lambda i, j, k: (i, j)),
            scratch_shapes=scratch,
        ),
        compiler_params=pltpu.CompilerParams(
            dimension_semantics=("parallel", "parallel", "arbitrary")),
    )(*inputs)

    if Mp != Morig or Np != Norig:
        out = out[:Morig, :Norig]
    return out


# --------------------------------------------------------------------------
# Elementwise Pallas kernels
# --------------------------------------------------------------------------
def _ew_kernel(*refs, fn):
    o_ref = refs[-1]
    o_ref[...] = fn(*[r[...] for r in refs[:-1]])


@functools.partial(jax.jit, static_argnums=(0,))
def pallas_elementwise(fn, *xs):
    shape = xs[0].shape
    n = int(np.prod(shape))
    C, TR = 1024, 256
    rows = max(_round_up(-(-n // C), TR), TR)
    total = rows * C
    flats = [jnp.pad(x.reshape(-1).astype(F32), (0, total - n)).reshape(rows, C)
             for x in xs]
    out = pl.pallas_call(
        functools.partial(_ew_kernel, fn=fn),
        out_shape=jax.ShapeDtypeStruct((rows, C), F32),
        grid=(rows // TR,),
        in_specs=[pl.BlockSpec((TR, C), lambda i: (i, 0)) for _ in xs],
        out_specs=pl.BlockSpec((TR, C), lambda i: (i, 0)),
    )(*flats)
    return out.reshape(-1)[:n].reshape(shape)


def _lrelu_fn(a):
    return jnp.where(a >= 0, a, 0.1 * a)


def _mul_fn(a, b):
    return a * b


def pallas_lrelu(x):
    return pallas_elementwise(_lrelu_fn, x)


def pallas_mul(a, b):
    return pallas_elementwise(_mul_fn, a, b)


def _scale_ch_kernel(x_ref, a_ref, o_ref):
    o_ref[...] = x_ref[...] * a_ref[...]


@jax.jit
def scale_channels(x, attn):
    """x: (B,H,W,C) NHWC, attn: (B,C) -> x * attn per channel (no broadcast)."""
    B, H, W, C = x.shape
    HW = H * W
    TR = 512
    while HW % TR != 0 and TR > 1:
        TR //= 2
    x2 = x.reshape(B, HW, C)
    a2 = attn.astype(x.dtype).reshape(B, 1, C)
    out = pl.pallas_call(
        _scale_ch_kernel,
        out_shape=jax.ShapeDtypeStruct((B, HW, C), x.dtype),
        grid=(B, HW // TR),
        in_specs=[pl.BlockSpec((1, TR, C), lambda b, i: (b, i, 0)),
                  pl.BlockSpec((1, 1, C), lambda b, i: (b, 0, 0))],
        out_specs=pl.BlockSpec((1, TR, C), lambda b, i: (b, i, 0)),
    )(x2, a2)
    return out.reshape(B, H, W, C)


# --------------------------------------------------------------------------
# Conv / ConvTranspose / Linear wrappers (NHWC) built on the matmul kernel
# --------------------------------------------------------------------------
@functools.partial(jax.jit, static_argnames=("k", "stride", "padding", "act"))
def _conv_fwd(x, wm, scale, shift, residual, *, k, stride, padding, act):
    B, H, W, C = x.shape
    cout = wm.shape[1]
    xb = x.astype(BF16)
    if k == 1 and stride == 1 and padding == 0:
        a = xb.reshape(B * H * W, C)
        Ho, Wo = H, W
    else:
        if padding:
            xb = jnp.pad(xb, ((0, 0), (padding, padding),
                              (padding, padding), (0, 0)))
        Hp, Wp = xb.shape[1], xb.shape[2]
        Ho = (Hp - k) // stride + 1
        Wo = (Wp - k) // stride + 1
        cols = []
        for di in range(k):
            for dj in range(k):
                cols.append(xb[:, di:di + stride * (Ho - 1) + 1:stride,
                               dj:dj + stride * (Wo - 1) + 1:stride, :])
        a = jnp.concatenate(cols, axis=-1).reshape(B * Ho * Wo, k * k * C)
    res2d = None
    if residual is not None:
        res2d = residual.reshape(B * Ho * Wo, cout)
    y = matmul_affine(a, wm, scale, shift, act=act, residual=res2d)
    return y.reshape(B, Ho, Wo, cout)


def conv_fwd(x, layer, act, stride=1, padding=1, residual=None):
    return _conv_fwd(x, layer["wm"], layer["scale"], layer["shift"], residual,
                     k=layer["k"], stride=stride, padding=padding, act=act)


@functools.partial(jax.jit, static_argnames=("act",))
def _convT_fwd(x, wm, scale, shift, *, act):
    """ConvTranspose2d(k=3, s=2, p=1, op=1) via sub-pixel 2x2-patch matmul."""
    B, H, W, C = x.shape
    cout = wm.shape[1] // 4
    xb = jnp.pad(x.astype(BF16), ((0, 0), (0, 1), (0, 1), (0, 0)))
    cols = [xb[:, di:di + H, dj:dj + W, :] for di in (0, 1) for dj in (0, 1)]
    a = jnp.concatenate(cols, axis=-1).reshape(B * H * W, 4 * C)
    y = matmul_affine(a, wm, scale, shift, act=act)          # (B*H*W, 4*cout)
    y = y.reshape(B, H, W, 2, 2, cout)
    y = y.transpose(0, 1, 3, 2, 4, 5).reshape(B, 2 * H, 2 * W, cout)
    return y


def convT_fwd(x, layer, act="lrelu"):
    return _convT_fwd(x, layer["wm"], layer["scale"], layer["shift"], act=act)


@functools.partial(jax.jit, static_argnames=("act",))
def _linear_fwd(x, wm, scale, shift, *, act):
    return matmul_affine(x, wm, scale, shift, act=act)


def linear_fwd(x, layer, act="none"):
    return _linear_fwd(x, layer["wm"], layer["scale"], layer["shift"], act=act)


# --------------------------------------------------------------------------
# Bilinear resize as two Pallas matmuls (NHWC, no transposes of big tensors)
# --------------------------------------------------------------------------
def _interp_matrix_np(n_out, n_in, align_corners):
    i = np.arange(n_out, dtype=np.float64)
    if align_corners:
        src = np.zeros(n_out) if n_out == 1 else i * (n_in - 1) / (n_out - 1)
    else:
        src = (i + 0.5) * n_in / n_out - 0.5
        src = np.clip(src, 0.0, None)
    x0 = np.clip(np.floor(src).astype(np.int64), 0, n_in - 1)
    x1 = np.minimum(x0 + 1, n_in - 1)
    lam = np.clip(src - x0, 0.0, 1.0)
    m = np.zeros((n_out, n_in), np.float32)
    rows = np.arange(n_out)
    m[rows, x0] += (1.0 - lam).astype(np.float32)
    m[rows, x1] += lam.astype(np.float32)
    return m


_RESIZE_CACHE = {}


def _resize_mats(B, h, w, C, Ho, Wo, align_corners):
    key = (B, h, w, C, Ho, Wo, align_corners)
    if key not in _RESIZE_CACHE:
        mw = _interp_matrix_np(Wo, w, align_corners)          # (Wo, w)
        wmat = np.zeros((w * C, Wo * C), np.float32)
        wr = wmat.reshape(w, C, Wo, C)
        idx = np.arange(C)
        wr[:, idx, :, idx] = mw.T                             # per-channel block
        mh = _interp_matrix_np(Ho, h, align_corners)          # (Ho, h)
        hmat = np.zeros((B * Ho, B * h), np.float32)
        for b in range(B):
            hmat[b * Ho:(b + 1) * Ho, b * h:(b + 1) * h] = mh
        _RESIZE_CACHE[key] = (jnp.asarray(wmat, BF16), jnp.asarray(hmat, BF16))
    return _RESIZE_CACHE[key]


@jax.jit
def _resize_apply(x, wmat, hmat):
    B, h, w, C = x.shape
    WoC = wmat.shape[1]
    Wo = WoC // C
    Ho = hmat.shape[0] // B
    ones_n = jnp.ones((WoC,), F32)
    zeros_n = jnp.zeros((WoC,), F32)
    a1 = x.reshape(B * h, w * C)
    y1 = matmul_affine(a1, wmat, ones_n, zeros_n, act="none", out_dtype=BF16)
    y2 = matmul_affine(hmat, y1, ones_n, zeros_n, act="none", out_dtype=F32)
    return y2.reshape(B, Ho, Wo, C)


def bilinear_resize(x, Ho, Wo, align_corners):
    B, h, w, C = x.shape
    if (h, w) == (Ho, Wo):
        return x
    wmat, hmat = _resize_mats(B, h, w, C, Ho, Wo, align_corners)
    return _resize_apply(x, wmat, hmat)


# --------------------------------------------------------------------------
# Parameter initialization (deterministic, synthetic)
# --------------------------------------------------------------------------
class KeyGen:
    def __init__(self, seed=42):
        self._key = jax.random.PRNGKey(seed)
        self._n = 0

    def __call__(self):
        self._n += 1
        return jax.random.fold_in(self._key, self._n)


def init_conv_layer(kg, cin, cout, k, bias, bn):
    w = jax.random.normal(kg(), (cout, cin, k, k), F32) * W_SCALE
    b = (jax.random.normal(kg(), (cout,), F32) * W_SCALE) if bias \
        else jnp.zeros((cout,), F32)
    s = BN_SCALE if bn else 1.0
    wm = jnp.transpose(w, (2, 3, 1, 0)).reshape(k * k * cin, cout).astype(BF16)
    return {"wm": wm,
            "scale": jnp.full((1, cout), s, F32),
            "shift": (s * b).reshape(1, cout).astype(F32),
            "k": k}


_H_TAP = {(0, 0): 1, (1, 0): 2, (1, 1): 0}   # (parity, patch offset) -> kernel idx


def init_convT_layer(kg, cin, cout, bn=True):
    # PyTorch ConvTranspose2d weight layout: (Cin, Cout, kh, kw), bias=True.
    w = jax.random.normal(kg(), (cin, cout, 3, 3), F32) * W_SCALE
    b = jax.random.normal(kg(), (cout,), F32) * W_SCALE
    wt = jnp.zeros((4 * cin, 4 * cout), F32)
    for pi in (0, 1):
        for di in (0, 1):
            hi = _H_TAP.get((pi, di))
            if hi is None:
                continue
            for pj in (0, 1):
                for dj in (0, 1):
                    wj = _H_TAP.get((pj, dj))
                    if wj is None:
                        continue
                    blk = w[:, :, hi, wj]                    # (cin, cout)
                    r0 = (di * 2 + dj) * cin
                    c0 = (pi * 2 + pj) * cout
                    wt = wt.at[r0:r0 + cin, c0:c0 + cout].set(blk)
    s = BN_SCALE if bn else 1.0
    return {"wm": wt.astype(BF16),
            "scale": jnp.full((1, 4 * cout), s, F32),
            "shift": jnp.tile(s * b, 4).reshape(1, 4 * cout).astype(F32)}


def init_linear_layer(kg, fin, fout):
    w = jax.random.normal(kg(), (fout, fin), F32) * W_SCALE
    b = jax.random.normal(kg(), (fout,), F32) * W_SCALE
    return {"wm": w.T.astype(BF16),
            "scale": jnp.ones((1, fout), F32),
            "shift": b.reshape(1, fout)}


def init_pool_layer(C, k=4):
    wm = np.zeros((k * k * C, C), np.float32)
    for t in range(k * k):
        wm[t * C + np.arange(C), np.arange(C)] = 1.0 / (k * k)
    return {"wm": jnp.asarray(wm, BF16),
            "scale": jnp.ones((1, C), F32),
            "shift": jnp.zeros((1, C), F32),
            "k": k}


def init_basic_block(kg, inplanes, planes, stride=1, downsample=False):
    p = {"conv1": init_conv_layer(kg, inplanes, planes, 3, False, True),
         "conv2": init_conv_layer(kg, planes, planes, 3, False, True),
         "stride": stride, "downsample": None}
    if downsample:
        p["downsample"] = init_conv_layer(kg, inplanes, planes, 1, False, True)
    return p


def init_hr_module(kg, num_branches, num_blocks, num_inchannels, num_channels,
                   multi_scale_output=True):
    num_inchannels = list(num_inchannels)
    branches = []
    for bi in range(num_branches):
        blocks = []
        inpl, ch = num_inchannels[bi], num_channels[bi]
        blocks.append(init_basic_block(kg, inpl, ch, 1, downsample=(inpl != ch)))
        num_inchannels[bi] = ch
        for _ in range(1, num_blocks[bi]):
            blocks.append(init_basic_block(kg, ch, ch, 1, False))
        branches.append(blocks)
    fuse = []
    n_fuse = num_branches if multi_scale_output else 1
    for i in range(n_fuse):
        row = []
        for j in range(num_branches):
            if j > i:
                row.append({"kind": "up",
                            "conv": init_conv_layer(kg, num_inchannels[j],
                                                    num_inchannels[i], 1,
                                                    False, True)})
            elif j == i:
                row.append(None)
            else:
                stages = []
                for k in range(i - j):
                    if k == i - j - 1:
                        outc = num_inchannels[i]
                        stages.append({"conv": init_conv_layer(
                            kg, num_inchannels[j], outc, 3, False, True),
                            "act": "none"})
                        stages.append({"conv": init_conv_layer(
                            kg, outc, outc, 3, False, True), "act": "none"})
                    else:
                        outc = num_inchannels[j]
                        stages.append({"conv": init_conv_layer(
                            kg, num_inchannels[j], outc, 3, False, True),
                            "act": "lrelu"})
                        stages.append({"conv": init_conv_layer(
                            kg, outc, outc, 3, False, True), "act": "lrelu"})
                row.append({"kind": "down", "stages": stages})
        fuse.append(row)
    return {"num_branches": num_branches, "branches": branches,
            "fuse": fuse, "out_channels": num_inchannels}


def init_stage(kg, scfg, num_inchannels):
    modules, ni = [], list(num_inchannels)
    for _ in range(scfg["NUM_MODULES"]):
        mod = init_hr_module(kg, scfg["NUM_BRANCHES"], scfg["NUM_BLOCKS"],
                             ni, scfg["NUM_CHANNELS"], True)
        ni = list(mod["out_channels"])
        modules.append(mod)
    return modules, ni


def init_conv_head(kg, inchannel, n_layer):
    layers, inchannel_temp = [], inchannel
    for i in range(n_layer):
        layers.append(init_conv_layer(kg, inchannel, inchannel_temp, 3, True, True))
        inchannel = inchannel_temp
        if i % 2 == 0:
            inchannel_temp = inchannel * 2
    return layers


def init_trans_head(kg, inchannel, n_layer):
    layers, inchannel_temp = [], inchannel
    for i in range(n_layer):
        layers.append(init_convT_layer(kg, inchannel, inchannel_temp, bn=True))
        inchannel = inchannel_temp
        if i % 2 == 0:
            inchannel_temp = inchannel // 2
    return layers


CFG = {
    "STAGE1": {"NUM_MODULES": 1, "NUM_BRANCHES": 2, "BLOCK": "BASIC",
               "NUM_BLOCKS": [1, 1], "NUM_CHANNELS": [32, 64],
               "FUSE_METHOD": "SUM"},
    "STAGE2": {"NUM_MODULES": 1, "NUM_BRANCHES": 3, "BLOCK": "BASIC",
               "NUM_BLOCKS": [1, 1, 1], "NUM_CHANNELS": [16, 32, 64],
               "FUSE_METHOD": "SUM"},
    "STAGE3": {"NUM_MODULES": 1, "NUM_BRANCHES": 4, "BLOCK": "BASIC",
               "NUM_BLOCKS": [1, 1, 1, 1], "NUM_CHANNELS": [8, 16, 32, 64],
               "FUSE_METHOD": "SUM"},
}


def init_model(kg):
    P = {}
    P["pool7"] = init_pool_layer(7, 4)
    P["conv_16"] = init_conv_layer(kg, 7, 32, 3, False, True)
    P["conv_4"] = [init_conv_layer(kg, 7, 64, 3, False, True),
                   init_conv_layer(kg, 64, 64, 3, False, True)]
    P["change_channel_cnn1"] = init_conv_layer(kg, 23, 16, 3, False, False)
    P["change_channel_cnn2"] = init_conv_layer(kg, 15, 8, 3, False, False)
    P["stage1"], _ = init_stage(kg, CFG["STAGE1"], [32, 64])
    P["stage2"], _ = init_stage(kg, CFG["STAGE2"], [16, 32, 64])
    P["stage3"], _ = init_stage(kg, CFG["STAGE3"], [8, 16, 32, 64])
    P["last_layer_att"] = {"conv1": init_conv_layer(kg, 120, 120, 1, True, True),
                           "conv2": init_conv_layer(kg, 120, 7, 1, True, False)}
    P["last_layer_mask"] = {"conv1": init_conv_layer(kg, 120, 120, 1, True, True),
                            "conv2": init_conv_layer(kg, 120, 1, 1, True, False)}
    P["first_16to64"] = init_trans_head(kg, 32, 2)
    P["first_4to64"] = init_trans_head(kg, 64, 4)
    P["first_16to1"] = init_conv_head(kg, 32, 4)
    P["first_4to1"] = init_conv_head(kg, 64, 2)
    P["middle_64to256"] = init_trans_head(kg, 16, 2)
    P["middle_16to256"] = init_trans_head(kg, 32, 4)
    P["middle_4to256"] = init_trans_head(kg, 64, 6)
    P["middle_64to1"] = init_conv_head(kg, 16, 6)
    P["middle_16to1"] = init_conv_head(kg, 32, 4)
    P["middle_4to1"] = init_conv_head(kg, 64, 2)
    P["final_256to1"] = init_conv_head(kg, 8, 8)
    P["final_64to1"] = init_conv_head(kg, 16, 6)
    P["final_16to1"] = init_conv_head(kg, 32, 4)
    P["final_4to1"] = init_conv_head(kg, 64, 2)
    P["att_linear"] = [init_linear_layer(kg, 128 * 3, 48),
                       init_linear_layer(kg, 48, 120)]
    return P


# --------------------------------------------------------------------------
# Forward pass (NHWC internally)
# --------------------------------------------------------------------------
def basic_block_fwd(p, x):
    out = conv_fwd(x, p["conv1"], "lrelu", stride=p["stride"], padding=1)
    identity = x
    if p["downsample"] is not None:
        identity = conv_fwd(x, p["downsample"], "none",
                            stride=p["stride"], padding=0)
    # conv2 + BN + residual add + LeakyReLU fused into one matmul epilogue
    return conv_fwd(out, p["conv2"], "lrelu", stride=1, padding=1,
                    residual=identity)


def fuse_apply(fp, x, th, tw):
    if fp["kind"] == "up":
        y = conv_fwd(x, fp["conv"], "none", stride=1, padding=0)
        return bilinear_resize(y, th, tw, align_corners=True)
    y = x
    for st in fp["stages"]:
        y = conv_fwd(y, st["conv"], st["act"], stride=2, padding=1)
    return y


def hr_module_fwd(p, xs):
    nb = p["num_branches"]
    xs = list(xs)
    for i in range(nb):
        for blk in p["branches"][i]:
            xs[i] = basic_block_fwd(blk, xs[i])
    if nb == 1:
        return [xs[0]]
    outs = []
    for i, row in enumerate(p["fuse"]):
        th, tw = xs[i].shape[1], xs[i].shape[2]
        y = xs[0] if i == 0 else fuse_apply(row[0], xs[0], th, tw)
        for j in range(1, nb):
            if i == j:
                y = y + xs[j]
            else:
                y = y + fuse_apply(row[j], xs[j], th, tw)
        outs.append(pallas_lrelu(y))
    return outs


def stage_fwd(modules, xs):
    for mod in modules:
        xs = hr_module_fwd(mod, xs)
    return xs


def conv_head_fwd(layers, x):
    for l in layers:
        x = conv_fwd(x, l, "lrelu", stride=2, padding=1)
    return x


def trans_head_fwd(layers, x):
    for l in layers:
        x = convT_fwd(x, l, "lrelu")
    return x


def last_layer_fwd(p, x, final_act):
    t = conv_fwd(x, p["conv1"], "lrelu", stride=1, padding=0)
    return conv_fwd(t, p["conv2"], final_act, stride=1, padding=0)


def model_fwd(P, x_nchw):
    x_raw = jnp.transpose(x_nchw, (0, 2, 3, 1))              # NHWC (B,256,256,7)
    x_64 = conv_fwd(x_raw, P["pool7"], "none", stride=4, padding=0)   # (B,64,64,7)
    x_16r = conv_fwd(x_64, P["pool7"], "none", stride=4, padding=0)   # (B,16,16,7)

    x_16 = conv_fwd(x_16r, P["conv_16"], "lrelu", stride=1, padding=1)
    x_4 = x_16r
    for l in P["conv_4"]:
        x_4 = conv_fwd(x_4, l, "lrelu", stride=2, padding=1)

    xf = stage_fwd(P["stage1"], [x_16, x_4])

    out64_s1 = (trans_head_fwd(P["first_16to64"], xf[0])
                + trans_head_fwd(P["first_4to64"], xf[1]))
    out1_s1 = (conv_head_fwd(P["first_16to1"], xf[0])
               + conv_head_fwd(P["first_4to1"], xf[1]))

    x64_in = jnp.concatenate([x_64, out64_s1], axis=-1)      # (B,64,64,23)
    x64_in = conv_fwd(x64_in, P["change_channel_cnn1"], "none", 1, 1)

    xf = stage_fwd(P["stage2"], [x64_in, xf[0], xf[1]])

    out256_s2 = (trans_head_fwd(P["middle_64to256"], xf[0])
                 + trans_head_fwd(P["middle_16to256"], xf[1])
                 + trans_head_fwd(P["middle_4to256"], xf[2]))
    out1_s2 = (conv_head_fwd(P["middle_64to1"], xf[0])
               + conv_head_fwd(P["middle_16to1"], xf[1])
               + conv_head_fwd(P["middle_4to1"], xf[2]))

    x256_in = jnp.concatenate([x_raw, out256_s2], axis=-1)   # (B,256,256,15)
    x256_in = conv_fwd(x256_in, P["change_channel_cnn2"], "none", 1, 1)

    xf = stage_fwd(P["stage3"], [x256_in, xf[0], xf[1], xf[2]])

    out1_s3 = (conv_head_fwd(P["final_256to1"], xf[0])
               + conv_head_fwd(P["final_64to1"], xf[1])
               + conv_head_fwd(P["final_16to1"], xf[2])
               + conv_head_fwd(P["final_4to1"], xf[3]))

    out1 = jnp.concatenate([out1_s1, out1_s2, out1_s3], axis=-1)   # (B,1,1,384)
    B = out1.shape[0]
    h = linear_fwd(out1.reshape(B, -1), P["att_linear"][0], act="none")
    attn = linear_fwd(h, P["att_linear"][1], act="sigmoid")        # (B,120)

    Ht, Wt = x_raw.shape[1], x_raw.shape[2]
    x1 = bilinear_resize(xf[1], Ht, Wt, align_corners=False)
    x2 = bilinear_resize(xf[2], Ht, Wt, align_corners=False)
    x3 = bilinear_resize(xf[3], Ht, Wt, align_corners=False)
    xcat = jnp.concatenate([xf[0], x1, x2, x3], axis=-1)           # (B,256,256,120)
    xcat = scale_channels(xcat, attn)

    s_att = last_layer_fwd(P["last_layer_att"], xcat, "sigmoid")   # (B,256,256,7)
    pixel_mask = last_layer_fwd(P["last_layer_mask"], xcat, "sigmoid")
    x_atted = pallas_mul(x_raw, s_att)

    to_nchw = lambda t: jnp.transpose(t, (0, 3, 1, 2))
    return to_nchw(x_atted), to_nchw(pixel_mask), to_nchw(s_att)


# --------------------------------------------------------------------------
if __name__ == "__main__":
    kg = KeyGen(42)
    params = init_model(kg)

    # The module hard-codes a 256x256 output resolution and 7 input channels,
    # so the input shape is forced; batch kept at 1 to stay small.
    x = jax.random.normal(jax.random.PRNGKey(0), (1, 7, 256, 256), jnp.float32)

    x_atted, pixel_mask, att_sig = model_fwd(params, x)
    (x_atted, pixel_mask, att_sig) = jax.block_until_ready(
        (x_atted, pixel_mask, att_sig))

    assert x_atted.shape == (1, 7, 256, 256)
    assert pixel_mask.shape == (1, 1, 256, 256)
    assert att_sig.shape == (1, 7, 256, 256)
    assert bool(jnp.isfinite(x_atted).all())
    assert bool(jnp.isfinite(pixel_mask).all())
    assert bool(jnp.isfinite(att_sig).all())
    print("KERNEL_OK")
</pallas_src>

<mosaic_0001>
module attributes {stable_mosaic.version = 11 : i64} {
  func.func @_mm_kernel(%arg0: i32, %arg1: i32, %arg2: i32, %arg3: memref<512x112xbf16, #tpu.memory_space<vmem>>, %arg4: memref<112x8xbf16, #tpu.memory_space<vmem>>, %arg5: memref<1x8xf32, #tpu.memory_space<vmem>>, %arg6: memref<1x8xf32, #tpu.memory_space<vmem>>, %arg7: memref<512x8xf32, #tpu.memory_space<vmem>>) attributes {dimension_semantics = [#tpu.dimension_semantics<parallel>, #tpu.dimension_semantics<parallel>, #tpu.dimension_semantics<arbitrary>], iteration_bounds = array<i64: 8, 1, 1>, scalar_prefetch = 0 : i64, scratch_operands = 0 : i64, tpu.core_type = #tpu.core_type<tc>, window_params = [{transform_indices = @transform_0, window_bounds = array<i64: 512, 112>}, {transform_indices = @transform_1, window_bounds = array<i64: 112, 8>}, {transform_indices = @transform_2, window_bounds = array<i64: 1, 8>}, {transform_indices = @transform_3, window_bounds = array<i64: 1, 8>}, {transform_indices = @transform_4, window_bounds = array<i64: 512, 8>}]} {
    %c0 = arith.constant 0 : index
    %c0_0 = arith.constant 0 : index
    %0 = vector.load %arg3[%c0, %c0_0] : memref<512x112xbf16, #tpu.memory_space<vmem>>, vector<512x112xbf16>
    %c0_1 = arith.constant 0 : index
    %c0_2 = arith.constant 0 : index
    %1 = vector.load %arg4[%c0_1, %c0_2] : memref<112x8xbf16, #tpu.memory_space<vmem>>, vector<112x8xbf16>
    %cst = arith.constant dense<0.000000e+00> : vector<512x8xf32>
    %2 = tpu.matmul %0, %1, %cst {dimension_numbers = #tpu.dot_dimension_numbers<[1], [0], [0], [1], [0, 0, 1, 1], [], []>} : vector<512x112xbf16>, vector<112x8xbf16>, vector<512x8xf32> -> vector<512x8xf32>
    %c0_3 = arith.constant 0 : index
    %c0_4 = arith.constant 0 : index
    %3 = vector.load %arg5[%c0_3, %c0_4] : memref<1x8xf32, #tpu.memory_space<vmem>>, vector<1x8xf32>
    %4 = vector.broadcast %3 : vector<1x8xf32> to vector<512x8xf32>
    %5 = arith.mulf %2, %4 : vector<512x8xf32>
    %c0_5 = arith.constant 0 : index
    %c0_6 = arith.constant 0 : index
    %6 = vector.load %arg6[%c0_5, %c0_6] : memref<1x8xf32, #tpu.memory_space<vmem>>, vector<1x8xf32>
    %7 = vector.broadcast %6 : vector<1x8xf32> to vector<512x8xf32>
    %8 = arith.addf %5, %7 : vector<512x8xf32>
    %c0_7 = arith.constant 0 : index
    %c0_8 = arith.constant 0 : index
    %9 = vector.load %arg7[%c0_7, %c0_8] : memref<512x8xf32, #tpu.memory_space<vmem>>, vector<512x8xf32>
    tpu.vector_store %arg7[%c0_7, %c0_8], %8 {strides = array<i32>} : memref<512x8xf32, #tpu.memory_space<vmem>>, vector<512x8xf32>,
    return
  }
  func.func @transform_0(%arg0: i32, %arg1: i32, %arg2: i32) -> (i32, i32) {
    %c0_i32 = arith.constant 0 : i32
    return %arg0, %arg2 : i32, i32
  }
  func.func @transform_1(%arg0: i32, %arg1: i32, %arg2: i32) -> (i32, i32) {
    %c0_i32 = arith.constant 0 : i32
    return %arg2, %arg1 : i32, i32
  }
  func.func @transform_2(%arg0: i32, %arg1: i32, %arg2: i32) -> (i32, i32) {
    %c0_i32 = arith.constant 0 : i32
    %c0_i32_0 = arith.constant 0 : i32
    return %c0_i32, %arg1 : i32, i32
  }
  func.func @transform_3(%arg0: i32, %arg1: i32, %arg2: i32) -> (i32, i32) {
    %c0_i32 = arith.constant 0 : i32
    %c0_i32_0 = arith.constant 0 : i32
    return %c0_i32, %arg1 : i32, i32
  }
  func.func @transform_4(%arg0: i32, %arg1: i32, %arg2: i32) -> (i32, i32) {
    %c0_i32 = arith.constant 0 : i32
    return %arg0, %arg1 : i32, i32
  }
}

</mosaic_0001>

<llo_original>
// kernel: _conv_fwd.1
$region0: #{_conv_fwd.1}
  #allocation0 [shape = 'u32[]', space=smem, size = 0x4, offset = 0x4, fixed_abs, tag = 'smem constant byte address 0x4 - core index']
  #allocation1 [shape = 'u32[144,128]{1,0:T(1,128)}', space=vmem, size = 0x12000, scoped, tag = 'internal scratch']
  %s0 = inlined_call_operand.vmem [shape: bf16[4096,112], index: 0, kind: input, shape index: {}]
  %s1 = inlined_call_operand.vmem [shape: bf16[112,8], index: 1, kind: input, shape index: {}]
  %s2 = inlined_call_operand.vmem [shape: f32[1,8], index: 2, kind: input, shape index: {}]
  %s3 = inlined_call_operand.vmem [shape: f32[1,8], index: 3, kind: input, shape index: {}]
  %s4 = inlined_call_operand.vmem [shape: f32[4096,8], index: 4, kind: output, shape index: {}]
  %s5 = sld [smem:[#allocation0]]
  $region49: #{_conv_fwd.1} parent=0
    _
  %s7 = ssub.s32 1, %s5
  %s8 = scalar_select 0, %s7, %s5
  loop: start=0, step=1, limit=10
  $region2: #{_conv_fwd.1} parent=0 // loop_pre_header
    _
  $region3: #{_conv_fwd.1} parent=0 // loop_header
    %s10 = sphi 0, %s14
    %p11 = scmp.ge.s32.totalorder %s10, 10
    %s17 = sphi 0, %s36
    %s18 = sphi 0, %s32
    %s19 = sphi 0, %s28
    %s20 = sphi 0, %s17
    %s21 = sphi 0, %s18
    %s22 = sphi 0, %s19
    %s23 = sphi 0, %s20
    %s24 = sphi 0, %s21
    %s25 = sphi 0, %s22
    %s41 = sphi 0, %s43
    %s44 = sphi 0, %s41
    %s45 = sphi 0, %s44
    %s61 = sphi 0, %s45
    %s69 = sphi 0, %s71
    %s72 = sphi 0, %s69
    %s73 = sphi 0, %s72
    %s89 = sphi 0, %s73
    %s95 = sphi 0, %s97
    %s98 = sphi 0, %s95
    %s99 = sphi 0, %s98
    %s115 = sphi 0, %s99
    %s121 = sphi 0, %s123
    %s124 = sphi 0, %s121
    %s125 = sphi 0, %s124
    %s141 = sphi 0, %s125
    %s149 = sphi 0, %s151
    %s152 = sphi 0, %s149
    %s153 = sphi 0, %s152
    %s169 = sphi 0, %s153
  $region4: #{_conv_fwd.1} parent=0 // loop_header_branch
    %13 = sbr.rel (%p11) target = $region8
  $region5: #{_conv_fwd.1} parent=0 // loop_body
    %s15 = ssub.s32 %s10, 1
    %s16 = ssub.s32 %s10, 2
    %s26 = sadd.s32 1, %s19
    %p27 = scmp.ge.s32.totalorder %s26, 1
    %s28 = scalar_select %p27, 0, %s26
    %s29 = sadd.s32 1, %s18
    %s30 = scalar_select %p27, %s29, %s18
    %p31 = scmp.ge.s32.totalorder %s30, 1
    %s32 = scalar_select %p31, 0, %s30
    %s33 = sadd.s32 1, %s17
    %s34 = scalar_select %p31, %s33, %s17
    %p35 = scmp.ge.s32.totalorder %s34, 8
    %s36 = scalar_select %p35, 0, %s34
    %s37 = ssub.s32 %s17, %s36
    %s38 = ssub.s32 %s19, %s28
    %s39 = sor.u32 %s37, %s38
    %p40 = scmp.eq.s32.totalorder %s39, 0
    %s42 = sadd.s32 %s41, 1
    %s43 = scalar_select %p40, %s41, %s42
    %p46 = pneg %p40
    %p47 = scmp.eq.s32.totalorder %s10, 7
    %p48 = por %p46, %p47
    %p49 = scmp.ne.s32.totalorder %s41, %s44
    %p50 = scmp.eq.s32.totalorder %s10, 0
    %p51 = por %p49, %p50
    %p52 = scmp.ne.s32.totalorder %s41, %s44
    %p53 = scmp.eq.s32.totalorder %s15, 7
    %p54 = por %p52, %p53
    %p55 = scmp.ne.s32.totalorder %s44, %s45
    %p56 = scmp.eq.s32.totalorder %s15, 0
    %p57 = por %p55, %p56
    %p58 = scmp.ne.s32.totalorder %s44, %s45
    %p59 = scmp.eq.s32.totalorder %s16, 7
    %p60 = por %p58, %p59
    %p62 = scmp.ne.s32.totalorder %s45, %s61
    %p63 = scmp.eq.s32.totalorder %s16, 0
    %p64 = por %p62, %p63
    %s65 = ssub.s32 %s19, %s28
    %s66 = ssub.s32 %s18, %s32
    %s67 = sor.u32 %s65, %s66
    %p68 = scmp.eq.s32.totalorder %s67, 0
    %s70 = sadd.s32 %s69, 1
    %s71 = scalar_select %p68, %s69, %s70
    %p74 = pneg %p68
    %p75 = scmp.eq.s32.totalorder %s10, 7
    %p76 = por %p74, %p75
    %p77 = scmp.ne.s32.totalorder %s69, %s72
    %p78 = scmp.eq.s32.totalorder %s10, 0
    %p79 = por %p77, %p78
    %p80 = scmp.ne.s32.totalorder %s69, %s72
    %p81 = scmp.eq.s32.totalorder %s15, 7
    %p82 = por %p80, %p81
    %p83 = scmp.ne.s32.totalorder %s72, %s73
    %p84 = scmp.eq.s32.totalorder %s15, 0
    %p85 = por %p83, %p84
    %p86 = scmp.ne.s32.totalorder %s72, %s73
    %p87 = scmp.eq.s32.totalorder %s16, 7
    %p88 = por %p86, %p87
    %p90 = scmp.ne.s32.totalorder %s73, %s89
    %p91 = scmp.eq.s32.totalorder %s16, 0
    %p92 = por %p90, %p91
    %s93 = ssub.s32 %s18, %s32
    %p94 = scmp.eq.s32.totalorder %s93, 0
    %s96 = sadd.s32 %s95, 1
    %s97 = scalar_select %p94, %s95, %s96
    %p100 = pneg %p94
    %p101 = scmp.eq.s32.totalorder %s10, 7
    %p102 = por %p100, %p101
    %p103 = scmp.ne.s32.totalorder %s95, %s98
    %p104 = scmp.eq.s32.totalorder %s10, 0
    %p105 = por %p103, %p104
    %p106 = scmp.ne.s32.totalorder %s95, %s98
    %p107 = scmp.eq.s32.totalorder %s15, 7
    %p108 = por %p106, %p107
    %p109 = scmp.ne.s32.totalorder %s98, %s99
    %p110 = scmp.eq.s32.totalorder %s15, 0
    %p111 = por %p109, %p110
    %p112 = scmp.ne.s32.totalorder %s98, %s99
    %p113 = scmp.eq.s32.totalorder %s16, 7
    %p114 = por %p112, %p113
    %p116 = scmp.ne.s32.totalorder %s99, %s115
    %p117 = scmp.eq.s32.totalorder %s16, 0
    %p118 = por %p116, %p117
    %s119 = ssub.s32 %s18, %s32
    %p120 = scmp.eq.s32.totalorder %s119, 0
    %s122 = sadd.s32 %s121, 1
    %s123 = scalar_select %p120, %s121, %s122
    %p126 = pneg %p120
    %p127 = scmp.eq.s32.totalorder %s10, 7
    %p128 = por %p126, %p127
    %p129 = scmp.ne.s32.totalorder %s121, %s124
    %p130 = scmp.eq.s32.totalorder %s10, 0
    %p131 = por %p129, %p130
    %p132 = scmp.ne.s32.totalorder %s121, %s124
    %p133 = scmp.eq.s32.totalorder %s15, 7
    %p134 = por %p132, %p133
    %p135 = scmp.ne.s32.totalorder %s124, %s125
    %p136 = scmp.eq.s32.totalorder %s15, 0
    %p137 = por %p135, %p136
    %p138 = scmp.ne.s32.totalorder %s124, %s125
    %p139 = scmp.eq.s32.totalorder %s16, 7
    %p140 = por %p138, %p139
    %p142 = scmp.ne.s32.totalorder %s125, %s141
    %p143 = scmp.eq.s32.totalorder %s16, 0
    %p144 = por %p142, %p143
    %s145 = ssub.s32 %s17, %s36
    %s146 = ssub.s32 %s18, %s32
    %s147 = sor.u32 %s145, %s146
    %p148 = scmp.eq.s32.totalorder %s147, 0
    %s150 = sadd.s32 %s149, 1
    %s151 = scalar_select %p148, %s149, %s150
    %p154 = pneg %p148
    %p155 = scmp.eq.s32.totalorder %s10, 7
    %p156 = por %p154, %p155
    %p157 = scmp.ne.s32.totalorder %s149, %s152
    %p158 = scmp.eq.s32.totalorder %s10, 0
    %p159 = por %p157, %p158
    %p160 = scmp.ne.s32.totalorder %s149, %s152
    %p161 = scmp.eq.s32.totalorder %s15, 7
    %p162 = por %p160, %p161
    %p163 = scmp.ne.s32.totalorder %s152, %s153
    %p164 = scmp.eq.s32.totalorder %s15, 0
    %p165 = por %p163, %p164
    %p166 = scmp.ne.s32.totalorder %s152, %s153
    %p167 = scmp.eq.s32.totalorder %s16, 7
    %p168 = por %p166, %p167
    %p170 = scmp.ne.s32.totalorder %s153, %s169
    %p171 = scmp.eq.s32.totalorder %s16, 0
    %p172 = por %p170, %p171
    %p173 = scmp.le.s32.totalorder 1, %s10
    %p174 = scmp.lt.s32.totalorder %s10, 9
    %p175 = pnand %p173, %p174
    %p176 = pneg %p175
    // Predicated region
    $region9: #{_conv_fwd.1} parent=5 // pred_check
      _
    $region10: #{_conv_fwd.1} parent=5 // pred_check_branch
      %178 = sbr.rel (%p175) target = $region12
    $region11: #{_conv_fwd.1} parent=5 // pred_region
      %s179 = ssub.s32 %s10, 1
      // Predicated region
      $region13: #{_conv_fwd.1} parent=11 // pred_check
        %p180 = pneg %p85
      $region14: #{_conv_fwd.1} parent=11 // pred_check_branch
        %182 = sbr.rel (%p180) target = $region16
      $region15: #{_conv_fwd.1} parent=11 // pred_region
        %s183 = smul.u32 14, %s22
        %p184 = scmp.lt.s32.totalorder %s183, 13
        %s185 = scalar_select %p184, %s183, 13
        %p186 = scmp.lt.s32.totalorder %s21, 0
        %s187 = scalar_select %p186, %s21, 0
        %s188 = sadd.s32 %s187, %s185
        %s189 = smul.addr %s188, 4
        %s190 = scalar_lea.vmem %s1, %s189
        %s191 = smul.u32 14, %s22
      $region16: #{_conv_fwd.1} parent=11 // pred_fallthru
        _
      // Predicated region
      $region17: #{_conv_fwd.1} parent=11 // pred_check
        %p192 = pneg %p111
      $region18: #{_conv_fwd.1} parent=11 // pred_check_branch
        %194 = sbr.rel (%p192) target = $region20
      $region19: #{_conv_fwd.1} parent=11 // pred_region
        %p195 = scmp.lt.s32.totalorder %s21, 0
        %s196 = scalar_select %p195, %s21, 0
        %s197 = scalar_lea.vmem %s2, %s196
      $region20: #{_conv_fwd.1} parent=11 // pred_fallthru
        _
      // Predicated region
      $region21: #{_conv_fwd.1} parent=11 // pred_check
        %p198 = pneg %p137
      $region22: #{_conv_fwd.1} parent=11 // pred_check_branch
        %200 = sbr.rel (%p198) target = $region24
      $region23: #{_conv_fwd.1} parent=11 // pred_region
        %p201 = scmp.lt.s32.totalorder %s21, 0
        %s202 = scalar_select %p201, %s21, 0
        %s203 = scalar_lea.vmem %s3, %s202
      $region24: #{_conv_fwd.1} parent=11 // pred_fallthru
        _
    $region12: #{_conv_fwd.1} parent=5 // pred_fallthru
      _
    %p204 = scmp.lt.s32.totalorder %s10, 8
    // Predicated region
    $region25: #{_conv_fwd.1} parent=5 // pred_check
      %p205 = pneg %p204
    $region26: #{_conv_fwd.1} parent=5 // pred_check_branch
      %207 = sbr.rel (%p205) target = $region28
    $region27: #{_conv_fwd.1} parent=5 // pred_region
      // Predicated region
      $region29: #{_conv_fwd.1} parent=27 // pred_check
        %p208 = pneg %p51
      $region30: #{_conv_fwd.1} parent=27 // pred_check_branch
        %210 = sbr.rel (%p208) target = $region32
      $region31: #{_conv_fwd.1} parent=27 // pred_region
        %s211 = smul.u32 64, %s17
        %p212 = scmp.lt.s32.totalorder %s211, 511
        %s213 = scalar_select %p212, %s211, 511
        %p214 = scmp.lt.s32.totalorder %s19, 0
        %s215 = scalar_select %p214, %s19, 0
        %s216 = sadd.s32 %s215, %s213
        %s217 = smul.addr %s216, 4
        %s218 = scalar_lea.vmem %s0, %s217
        %s219 = smul.u32 64, %s17
      $region32: #{_conv_fwd.1} parent=27 // pred_fallthru
        _
    $region28: #{_conv_fwd.1} parent=5 // pred_fallthru
      _
    %p220 = scmp.le.s32.totalorder 1, %s10
    %p221 = scmp.lt.s32.totalorder %s10, 9
    %p222 = pnand %p220, %p221
    %p223 = pneg %p222
    // Predicated region
    $region33: #{_conv_fwd.1} parent=5 // pred_check
      _
    $region34: #{_conv_fwd.1} parent=5 // pred_check_branch
      %225 = sbr.rel (%p222) target = $region36
    $region35: #{_conv_fwd.1} parent=5 // pred_region
      %s226 = ssub.s32 %s10, 1
      %s227 = smul.u32 64, %s20
      %p228 = scmp.lt.s32.totalorder %s227, 511
      %s229 = scalar_select %p228, %s227, 511
      %p230 = scmp.lt.s32.totalorder %s22, 0
      %s231 = scalar_select %p230, %s22, 0
      %s232 = sadd.s32 %s231, %s229
      %s233 = smul.addr %s232, 4
      %s234 = scalar_lea.vmem %s0, %s233
      %p235 = pneg %p57
      %p236 = pneg %p54
      %s237 = smul.u32 14, %s22
      %p238 = scmp.lt.s32.totalorder %s237, 13
      %s239 = scalar_select %p238, %s237, 13
      %p240 = scmp.lt.s32.totalorder %s21, 0
      %s241 = scalar_select %p240, %s21, 0
      %s242 = sadd.s32 %s241, %s239
      %s243 = smul.addr %s242, 4
      %s244 = scalar_lea.vmem %s1, %s243
      %p245 = pneg %p85
      %p246 = pneg %p82
      %p247 = scmp.lt.s32.totalorder %s21, 0
      %s248 = scalar_select %p247, %s21, 0
      %s249 = scalar_lea.vmem %s2, %s248
      %p250 = pneg %p111
      %p251 = pneg %p108
      %p252 = scmp.lt.s32.totalorder %s21, 0
      %s253 = scalar_select %p252, %s21, 0
      %s254 = scalar_lea.vmem %s3, %s253
      %p255 = pneg %p137
      %p256 = pneg %p134
      %p257 = pneg %p165
      %p258 = pneg %p162
      %s259 = smul.u32 64, %s20
      %p260 = scmp.lt.s32.totalorder %s259, 511
      %s261 = scalar_select %p260, %s259, 511
      %p262 = scmp.lt.s32.totalorder %s21, 0
      %s263 = scalar_select %p262, %s21, 0
      %s264 = sadd.s32 %s263, %s261
      %s265 = smul.addr %s264, 8
      %s266 = scalar_lea.vmem %s4, %s265
      %s267 = smul.u32 64, %s20
      %p268 = scmp.lt.s32.totalorder %s267, 511
      %s269 = scalar_select %p268, %s267, 511
      %p270 = scmp.lt.s32.totalorder %s22, 0
      %s271 = scalar_select %p270, %s22, 0
      %s272 = sadd.s32 %s271, %s269
      %s273 = smul.addr %s272, 4
      %s274 = scalar_lea.vmem %s0, %s273
      %s275 = smul.u32 64, %s20
      %s276 = smul.u32 14, %s22
      %p277 = scmp.lt.s32.totalorder %s276, 13
      %s278 = scalar_select %p277, %s276, 13
      %p279 = scmp.lt.s32.totalorder %s21, 0
      %s280 = scalar_select %p279, %s21, 0
      %s281 = sadd.s32 %s280, %s278
      %s282 = smul.addr %s281, 4
      %s283 = scalar_lea.vmem %s1, %s282
      %s284 = smul.u32 14, %s22
      %p285 = scmp.lt.s32.totalorder %s21, 0
      %s286 = scalar_select %p285, %s21, 0
      %s287 = scalar_lea.vmem %s2, %s286
      %p288 = scmp.lt.s32.totalorder %s21, 0
      %s289 = scalar_select %p288, %s21, 0
      %s290 = scalar_lea.vmem %s3, %s289
      %s291 = smul.u32 64, %s20
      %p292 = scmp.lt.s32.totalorder %s291, 511
      %s293 = scalar_select %p292, %s291, 511
      %p294 = scmp.lt.s32.totalorder %s21, 0
      %s295 = scalar_select %p294, %s21, 0
      %s296 = sadd.s32 %s295, %s293
      %s297 = smul.addr %s296, 8
      %s298 = scalar_lea.vmem %s4, %s297
      %s299 = smul.u32 64, %s20
      %v301 = vld [vmem:[%s274] sm:$0xf]
      %v302 = vld [vmem:[%s274 + $0x4] sm:$0xf]
      %v303 = vld [vmem:[%s274 + $0x8] sm:$0xf]
      %v304 = vld [vmem:[%s274 + $0xc] sm:$0xf]
      %v305 = vld [vmem:[%s274 + $0x10] sm:$0xf]
      %v306 = vld [vmem:[%s274 + $0x14] sm:$0xf]
      %v307 = vld [vmem:[%s274 + $0x18] sm:$0xf]
      %v308 = vld [vmem:[%s274 + $0x1c] sm:$0xf]
      %v309 = vld [vmem:[%s274 + $0x20] sm:$0xf]
      %v310 = vld [vmem:[%s274 + $0x24] sm:$0xf]
      %v311 = vld [vmem:[%s274 + $0x28] sm:$0xf]
      %v312 = vld [vmem:[%s274 + $0x2c] sm:$0xf]
      %v313 = vld [vmem:[%s274 + $0x30] sm:$0xf]
      %v314 = vld [vmem:[%s274 + $0x34] sm:$0xf]
      %v315 = vld [vmem:[%s274 + $0x38] sm:$0xf]
      %v316 = vld [vmem:[%s274 + $0x3c] sm:$0xf]
      %v317 = vld [vmem:[%s274 + $0x40] sm:$0xf]
      %v318 = vld [vmem:[%s274 + $0x44] sm:$0xf]
      %v319 = vld [vmem:[%s274 + $0x48] sm:$0xf]
      %v320 = vld [vmem:[%s274 + $0x4c] sm:$0xf]
      %v321 = vld [vmem:[%s274 + $0x50] sm:$0xf]
      %v322 = vld [vmem:[%s274 + $0x54] sm:$0xf]
      %v323 = vld [vmem:[%s274 + $0x58] sm:$0xf]
      %v324 = vld [vmem:[%s274 + $0x5c] sm:$0xf]
      %v325 = vld [vmem:[%s274 + $0x60] sm:$0xf]
      %v326 = vld [vmem:[%s274 + $0x64] sm:$0xf]
      %v327 = vld [vmem:[%s274 + $0x68] sm:$0xf]
      %v328 = vld [vmem:[%s274 + $0x6c] sm:$0xf]
      %v329 = vld [vmem:[%s274 + $0x70] sm:$0xf]
      %v330 = vld [vmem:[%s274 + $0x74] sm:$0xf]
      %v331 = vld [vmem:[%s274 + $0x78] sm:$0xf]
      %v332 = vld [vmem:[%s274 + $0x7c] sm:$0xf]
      %v333 = vld [vmem:[%s274 + $0x80] sm:$0xf]
      %v334 = vld [vmem:[%s274 + $0x84] sm:$0xf]
      %v335 = vld [vmem:[%s274 + $0x88] sm:$0xf]
      %v336 = vld [vmem:[%s274 + $0x8c] sm:$0xf]
      %v337 = vld [vmem:[%s274 + $0x90] sm:$0xf]
      %v338 = vld [vmem:[%s274 + $0x94] sm:$0xf]
      %v339 = vld [vmem:[%s274 + $0x98] sm:$0xf]
      %v340 = vld [vmem:[%s274 + $0x9c] sm:$0xf]
      %v341 = vld [vmem:[%s274 + $0xa0] sm:$0xf]
      %v342 = vld [vmem:[%s274 + $0xa4] sm:$0xf]
      %v343 = vld [vmem:[%s274 + $0xa8] sm:$0xf]
      %v344 = vld [vmem:[%s274 + $0xac] sm:$0xf]
      %v345 = vld [vmem:[%s274 + $0xb0] sm:$0xf]
      %v346 = vld [vmem:[%s274 + $0xb4] sm:$0xf]
      %v347 = vld [vmem:[%s274 + $0xb8] sm:$0xf]
      %v348 = vld [vmem:[%s274 + $0xbc] sm:$0xf]
      %v349 = vld [vmem:[%s274 + $0xc0] sm:$0xf]
      %v350 = vld [vmem:[%s274 + $0xc4] sm:$0xf]
      %v351 = vld [vmem:[%s274 + $0xc8] sm:$0xf]
      %v352 = vld [vmem:[%s274 + $0xcc] sm:$0xf]
      %v353 = vld [vmem:[%s274 + $0xd0] sm:$0xf]
      %v354 = vld [vmem:[%s274 + $0xd4] sm:$0xf]
      %v355 = vld [vmem:[%s274 + $0xd8] sm:$0xf]
      %v356 = vld [vmem:[%s274 + $0xdc] sm:$0xf]
      %v357 = vld [vmem:[%s274 + $0xe0] sm:$0xf]
      %v358 = vld [vmem:[%s274 + $0xe4] sm:$0xf]
      %v359 = vld [vmem:[%s274 + $0xe8] sm:$0xf]
      %v360 = vld [vmem:[%s274 + $0xec] sm:$0xf]
      %v361 = vld [vmem:[%s274 + $0xf0] sm:$0xf]
      %v362 = vld [vmem:[%s274 + $0xf4] sm:$0xf]
      %v363 = vld [vmem:[%s274 + $0xf8] sm:$0xf]
      %v364 = vld [vmem:[%s274 + $0xfc] sm:$0xf]
      %v365 = vld [vmem:[%s283] sm:$0xf]
      %v366 = vld [vmem:[%s283 + $0x4] sm:$0xf]
      %v367 = vld [vmem:[%s283 + $0x8] sm:$0xf]
      %v368 = vld [vmem:[%s283 + $0xc] sm:$0xf]
      %v369 = vld [vmem:[%s283 + $0x10] sm:$0xf]
      %v370 = vld [vmem:[%s283 + $0x14] sm:$0xf]
      %v371 = vld [vmem:[%s283 + $0x18] sm:$0xf]
      %v372 = vld [vmem:[%s283 + $0x1c] sm:$0xf]
      %v373 = vld [vmem:[%s283 + $0x20] sm:$0xf]
      %v374 = vld [vmem:[%s283 + $0x24] sm:$0xf]
      %v375 = vld [vmem:[%s283 + $0x28] sm:$0xf]
      %v376 = vld [vmem:[%s283 + $0x2c] sm:$0xf]
      %v377 = vld [vmem:[%s283 + $0x30] sm:$0xf]
      %v378 = vld [vmem:[%s283 + $0x34] sm:$0xf]
      %v443 = vunpack.c.l.b16 %v301
      %v444 = vunpack.c.l.b16 %v302
      %v445 = vunpack.c.l.b16 %v303
      %v446 = vunpack.c.l.b16 %v304
      %v447 = vunpack.c.l.b16 %v305
      %v448 = vunpack.c.l.b16 %v306
      %v449 = vunpack.c.l.b16 %v307
      %v450 = vunpack.c.l.b16 %v308
      %v451 = vunpack.c.l.b16 %v309
      %v452 = vunpack.c.l.b16 %v310
      %v453 = vunpack.c.l.b16 %v311
      %v454 = vunpack.c.l.b16 %v312
      %v455 = vunpack.c.l.b16 %v313
      %v456 = vunpack.c.l.b16 %v314
      %v457 = vunpack.c.l.b16 %v315
      %v458 = vunpack.c.l.b16 %v316
      %v459 = vunpack.c.l.b16 %v317
      %v460 = vunpack.c.l.b16 %v318
      %v461 = vunpack.c.l.b16 %v319
      %v462 = vunpack.c.l.b16 %v320
      %v463 = vunpack.c.l.b16 %v321
      %v464 = vunpack.c.l.b16 %v322
      %v465 = vunpack.c.l.b16 %v323
      %v466 = vunpack.c.l.b16 %v324
      %v467 = vunpack.c.l.b16 %v325
      %v468 = vunpack.c.l.b16 %v326
      %v469 = vunpack.c.l.b16 %v327
      %v470 = vunpack.c.l.b16 %v328
      %v471 = vunpack.c.l.b16 %v329
      %v472 = vunpack.c.l.b16 %v330
      %v473 = vunpack.c.l.b16 %v331
      %v474 = vunpack.c.l.b16 %v332
      %v475 = vunpack.c.l.b16 %v333
      %v476 = vunpack.c.l.b16 %v334
      %v477 = vunpack.c.l.b16 %v335
      %v478 = vunpack.c.l.b16 %v336
      %v479 = vunpack.c.l.b16 %v337
      %v480 = vunpack.c.l.b16 %v338
      %v481 = vunpack.c.l.b16 %v339
      %v482 = vunpack.c.l.b16 %v340
      %v483 = vunpack.c.l.b16 %v341
      %v484 = vunpack.c.l.b16 %v342
      %v485 = vunpack.c.l.b16 %v343
      %v486 = vunpack.c.l.b16 %v344
      %v487 = vunpack.c.l.b16 %v345
      %v488 = vunpack.c.l.b16 %v346
      %v489 = vunpack.c.l.b16 %v347
      %v490 = vunpack.c.l.b16 %v348
      %v491 = vunpack.c.l.b16 %v349
      %v492 = vunpack.c.l.b16 %v350
      %v493 = vunpack.c.l.b16 %v351
      %v494 = vunpack.c.l.b16 %v352
      %v495 = vunpack.c.l.b16 %v353
      %v496 = vunpack.c.l.b16 %v354
      %v497 = vunpack.c.l.b16 %v355
      %v498 = vunpack.c.l.b16 %v356
      %v499 = vunpack.c.l.b16 %v357
      %v500 = vunpack.c.l.b16 %v358
      %v501 = vunpack.c.l.b16 %v359
      %v502 = vunpack.c.l.b16 %v360
      %v503 = vunpack.c.l.b16 %v361
      %v504 = vunpack.c.l.b16 %v362
      %v505 = vunpack.c.l.b16 %v363
      %v506 = vunpack.c.l.b16 %v364
      %v507 = vpack.c.b16 %v444, %v443
      %v508 = vpack.c.b16 %v446, %v445
      %v509 = vpack.c.b16 %v448, %v447
      %v510 = vpack.c.b16 %v450, %v449
      %v511 = vpack.c.b16 %v452, %v451
      %v512 = vpack.c.b16 %v454, %v453
      %v513 = vpack.c.b16 %v456, %v455
      %v514 = vpack.c.b16 %v458, %v457
      %v515 = vpack.c.b16 %v460, %v459
      %v516 = vpack.c.b16 %v462, %v461
      %v517 = vpack.c.b16 %v464, %v463
      %v518 = vpack.c.b16 %v466, %v465
      %v519 = vpack.c.b16 %v468, %v467
      %v520 = vpack.c.b16 %v470, %v469
      %v521 = vpack.c.b16 %v472, %v471
      %v522 = vpack.c.b16 %v474, %v473
      %v523 = vpack.c.b16 %v476, %v475
      %v524 = vpack.c.b16 %v478, %v477
      %v525 = vpack.c.b16 %v480, %v479
      %v526 = vpack.c.b16 %v482, %v481
      %v527 = vpack.c.b16 %v484, %v483
      %v528 = vpack.c.b16 %v486, %v485
      %v529 = vpack.c.b16 %v488, %v487
      %v530 = vpack.c.b16 %v490, %v489
      %v531 = vpack.c.b16 %v492, %v491
      %v532 = vpack.c.b16 %v494, %v493
      %v533 = vpack.c.b16 %v496, %v495
      %v534 = vpack.c.b16 %v498, %v497
      %v535 = vpack.c.b16 %v500, %v499
      %v536 = vpack.c.b16 %v502, %v501
      %v537 = vpack.c.b16 %v504, %v503
      %v538 = vpack.c.b16 %v506, %v505
      %v553 = vunpack.c.l.b16 %v365
      %v554 = vunpack.c.l.b16 %v366
      %v555 = vunpack.c.l.b16 %v367
      %v556 = vunpack.c.l.b16 %v368
      %v557 = vunpack.c.l.b16 %v369
      %v558 = vunpack.c.l.b16 %v370
      %v559 = vunpack.c.l.b16 %v371
      %v560 = vunpack.c.l.b16 %v372
      %v561 = vunpack.c.l.b16 %v373
      %v562 = vunpack.c.l.b16 %v374
      %v563 = vunpack.c.l.b16 %v375
      %v564 = vunpack.c.l.b16 %v376
      %v565 = vunpack.c.l.b16 %v377
      %v566 = vunpack.c.l.b16 %v378
      %v567 = vpack.c.b16 %v554, %v553
      %v568 = vpack.c.b16 %v556, %v555
      %v569 = vpack.c.b16 %v558, %v557
      %v570 = vpack.c.b16 %v560, %v559
      %v571 = vpack.c.b16 %v562, %v561
      %v572 = vpack.c.b16 %v564, %v563
      %v573 = vpack.c.b16 %v566, %v565
      %vm581 = vcmask 916480
      %v583 = vsel %vm581, %v507, 0
      %v586 = vsel %vm581, %v508, 0
      %v589 = vsel %vm581, %v509, 0
      %v592 = vsel %vm581, %v510, 0
      %v595 = vsel %vm581, %v511, 0
      %v598 = vsel %vm581, %v512, 0
      %v601 = vsel %vm581, %v513, 0
      %v604 = vsel %vm581, %v514, 0
      %v607 = vsel %vm581, %v515, 0
      %v610 = vsel %vm581, %v516, 0
      %v613 = vsel %vm581, %v517, 0
      %v616 = vsel %vm581, %v518, 0
      %v619 = vsel %vm581, %v519, 0
      %v622 = vsel %vm581, %v520, 0
      %v625 = vsel %vm581, %v521, 0
      %v628 = vsel %vm581, %v522, 0
      %v631 = vsel %vm581, %v523, 0
      %v634 = vsel %vm581, %v524, 0
      %v637 = vsel %vm581, %v525, 0
      %v640 = vsel %vm581, %v526, 0
      %v643 = vsel %vm581, %v527, 0
      %v646 = vsel %vm581, %v528, 0
      %v649 = vsel %vm581, %v529, 0
      %v652 = vsel %vm581, %v530, 0
      %v655 = vsel %vm581, %v531, 0
      %v658 = vsel %vm581, %v532, 0
      %v661 = vsel %vm581, %v533, 0
      %v664 = vsel %vm581, %v534, 0
      %v667 = vsel %vm581, %v535, 0
      %v670 = vsel %vm581, %v536, 0
      %v673 = vsel %vm581, %v537, 0
      %v676 = vsel %vm581, %v538, 0
      %678 = vmatprep.subr.bf16.mxu0 0
      %679 = vmatpush1.bf16.msra.mxu0 %v567
      %680 = vmatprep.subr.bf16.mxu0 0
      %681 = vmatpush1.bf16.msra.mxu0 %v568
      %682 = vmatprep.subr.bf16.mxu0 0
      %683 = vmatpush1.bf16.msra.mxu0 %v569
      %684 = vmatprep.subr.bf16.mxu0 0
      %685 = vmatpush1.bf16.msra.mxu0 %v570
      %686 = vmatprep.subr.bf16.mxu0 0
      %687 = vmatpush1.bf16.msra.mxu0 %v571
      %688 = vmatprep.subr.bf16.mxu0 0
      %689 = vmatpush1.bf16.msra.mxu0 %v572
      %690 = vmatprep.subr.bf16.mxu0 0
      %691 = vmatpush1.bf16.msra.mxu0 %v573
      %692 = vmatprep.subr.bf16.mxu0 0
      %693 = vmatpush1.bf16.msra.mxu0 0
      %694 = vmatprep.subr.bf16.mxu0 0
      %695 = vmatpush1.bf16.msra.mxu0 0
      %696 = vmatprep.subr.bf16.mxu0 0
      %697 = vmatpush1.bf16.msra.mxu0 0
      %698 = vmatprep.subr.bf16.mxu0 0
      %699 = vmatpush1.bf16.msra.mxu0 0
      %700 = vmatprep.subr.bf16.mxu0 0
      %701 = vmatpush1.bf16.msra.mxu0 0
      %702 = vmatprep.subr.bf16.mxu0 0
      %703 = vmatpush1.bf16.msra.mxu0 0
      %704 = vmatprep.subr.bf16.mxu0 0
      %705 = vmatpush1.bf16.msra.mxu0 0
      %706 = vmatprep.subr.bf16.mxu0 0
      %707 = vmatpush1.bf16.msra.mxu0 0
      %708 = vmatprep.subr.bf16.mxu0 0
      %709 = vmatpush1.bf16.msra.mxu0 0
      %710 = vmatprep.mubr.bf16.mxu0 0
      %711 = vmatmul.mubr.bf16.gmra.mrb[0].mxu0 %v583
      %v712 = vpop.f32.mrb[0].mxu0
      %v713 = vadd.f32 0.0, %v712
      %v714 = vpop.f32.mrb[0].mxu0
      %v715 = vpop.f32.mrb[0].mxu0
      %v716 = vadd.f32 0.0, %v715
      %v717 = vpop.f32.mrb[0].mxu0
      %718 = vmatprep.mubr.bf16.mxu0 0
      %719 = vmatmul.mubr.bf16.gmra.mrb[0].mxu0 %v586
      %v720 = vpop.f32.mrb[0].mxu0
      %v721 = vadd.f32 0.0, %v720
      %v722 = vpop.f32.mrb[0].mxu0
      %v723 = vpop.f32.mrb[0].mxu0
      %v724 = vadd.f32 0.0, %v723
      %v725 = vpop.f32.mrb[0].mxu0
      %726 = vmatprep.mubr.bf16.mxu0 0
      %727 = vmatmul.mubr.bf16.gmra.mrb[0].mxu0 %v589
      %v728 = vpop.f32.mrb[0].mxu0
      %v729 = vadd.f32 0.0, %v728
      %v730 = vpop.f32.mrb[0].mxu0
      %v731 = vpop.f32.mrb[0].mxu0
      %v732 = vadd.f32 0.0, %v731
      %v733 = vpop.f32.mrb[0].mxu0
      %734 = vmatprep.mubr.bf16.mxu0 0
      %735 = vmatmul.mubr.bf16.gmra.mrb[0].mxu0 %v592
      %v736 = vpop.f32.mrb[0].mxu0
      %v737 = vadd.f32 0.0, %v736
      %v738 = vpop.f32.mrb[0].mxu0
      %v739 = vpop.f32.mrb[0].mxu0
      %v740 = vadd.f32 0.0, %v739
      %v741 = vpop.f32.mrb[0].mxu0
      %742 = vmatprep.mubr.bf16.mxu0 0
      %743 = vmatmul.mubr.bf16.gmra.mrb[0].mxu0 %v595
      %v744 = vpop.f32.mrb[0].mxu0
      %v745 = vadd.f32 0.0, %v744
      %v746 = vpop.f32.mrb[0].mxu0
      %v747 = vpop.f32.mrb[0].mxu0
      %v748 = vadd.f32 0.0, %v747
      %v749 = vpop.f32.mrb[0].mxu0
      %750 = vmatprep.mubr.bf16.mxu0 0
      %751 = vmatmul.mubr.bf16.gmra.mrb[0].mxu0 %v598
      %v752 = vpop.f32.mrb[0].mxu0
      %v753 = vadd.f32 0.0, %v752
      %v754 = vpop.f32.mrb[0].mxu0
      %v755 = vpop.f32.mrb[0].mxu0
      %v756 = vadd.f32 0.0, %v755
      %v757 = vpop.f32.mrb[0].mxu0
      %758 = vmatprep.mubr.bf16.mxu0 0
      %759 = vmatmul.mubr.bf16.gmra.mrb[0].mxu0 %v601
      %v760 = vpop.f32.mrb[0].mxu0
      %v761 = vadd.f32 0.0, %v760
      %v762 = vpop.f32.mrb[0].mxu0
      %v763 = vpop.f32.mrb[0].mxu0
      %v764 = vadd.f32 0.0, %v763
      %v765 = vpop.f32.mrb[0].mxu0
      %766 = vmatprep.mubr.bf16.mxu0 0
      %767 = vmatmul.mubr.bf16.gmra.mrb[0].mxu0 %v604
      %v768 = vpop.f32.mrb[0].mxu0
      %v769 = vadd.f32 0.0, %v768
      %v770 = vpop.f32.mrb[0].mxu0
      %v771 = vpop.f32.mrb[0].mxu0
      %v772 = vadd.f32 0.0, %v771
      %v773 = vpop.f32.mrb[0].mxu0
      %774 = vmatprep.mubr.bf16.mxu0 0
      %775 = vmatmul.mubr.bf16.gmra.mrb[0].mxu0 %v607
      %v776 = vpop.f32.mrb[0].mxu0
      %v777 = vadd.f32 0.0, %v776
      %v778 = vpop.f32.mrb[0].mxu0
      %v779 = vpop.f32.mrb[0].mxu0
      %v780 = vadd.f32 0.0, %v779
      %v781 = vpop.f32.mrb[0].mxu0
      %782 = vmatprep.mubr.bf16.mxu0 0
      %783 = vmatmul.mubr.bf16.gmra.mrb[0].mxu0 %v610
      %v784 = vpop.f32.mrb[0].mxu0
      %v785 = vadd.f32 0.0, %v784
      %v786 = vpop.f32.mrb[0].mxu0
      %v787 = vpop.f32.mrb[0].mxu0
      %v788 = vadd.f32 0.0, %v787
      %v789 = vpop.f32.mrb[0].mxu0
      %790 = vmatprep.mubr.bf16.mxu0 0
      %791 = vmatmul.mubr.bf16.gmra.mrb[0].mxu0 %v613
      %v792 = vpop.f32.mrb[0].mxu0
      %v793 = vadd.f32 0.0, %v792
      %v794 = vpop.f32.mrb[0].mxu0
      %v795 = vpop.f32.mrb[0].mxu0
      %v796 = vadd.f32 0.0, %v795
      %v797 = vpop.f32.mrb[0].mxu0
      %798 = vmatprep.mubr.bf16.mxu0 0
      %799 = vmatmul.mubr.bf16.gmra.mrb[0].mxu0 %v616
      %v800 = vpop.f32.mrb[0].mxu0
      %v801 = vadd.f32 0.0, %v800
      %v802 = vpop.f32.mrb[0].mxu0
      %v803 = vpop.f32.mrb[0].mxu0
      %v804 = vadd.f32 0.0, %v803
      %v805 = vpop.f32.mrb[0].mxu0
      %806 = vmatprep.mubr.bf16.mxu0 0
      %807 = vmatmul.mubr.bf16.gmra.mrb[0].mxu0 %v619
      %v808 = vpop.f32.mrb[0].mxu0
      %v809 = vadd.f32 0.0, %v808
      %v810 = vpop.f32.mrb[0].mxu0
      %v811 = vpop.f32.mrb[0].mxu0
      %v812 = vadd.f32 0.0, %v811
      %v813 = vpop.f32.mrb[0].mxu0
      %814 = vmatprep.mubr.bf16.mxu0 0
      %815 = vmatmul.mubr.bf16.gmra.mrb[0].mxu0 %v622
      %v816 = vpop.f32.mrb[0].mxu0
      %v817 = vadd.f32 0.0, %v816
      %v818 = vpop.f32.mrb[0].mxu0
      %v819 = vpop.f32.mrb[0].mxu0
      %v820 = vadd.f32 0.0, %v819
      %v821 = vpop.f32.mrb[0].mxu0
      %822 = vmatprep.mubr.bf16.mxu0 0
      %823 = vmatmul.mubr.bf16.gmra.mrb[0].mxu0 %v625
      %v824 = vpop.f32.mrb[0].mxu0
      %v825 = vadd.f32 0.0, %v824
      %v826 = vpop.f32.mrb[0].mxu0
      %v827 = vpop.f32.mrb[0].mxu0
      %v828 = vadd.f32 0.0, %v827
      %v829 = vpop.f32.mrb[0].mxu0
      %830 = vmatprep.mubr.bf16.mxu0 0
      %831 = vmatmul.mubr.bf16.gmra.mrb[0].mxu0 %v628
      %v832 = vpop.f32.mrb[0].mxu0
      %v833 = vadd.f32 0.0, %v832
      %v834 = vpop.f32.mrb[0].mxu0
      %v835 = vpop.f32.mrb[0].mxu0
      %v836 = vadd.f32 0.0, %v835
      %v837 = vpop.f32.mrb[0].mxu0
      %838 = vmatprep.mubr.bf16.mxu0 0
      %839 = vmatmul.mubr.bf16.gmra.mrb[0].mxu0 %v631
      %v840 = vpop.f32.mrb[0].mxu0
      %v841 = vadd.f32 0.0, %v840
      %v842 = vpop.f32.mrb[0].mxu0
      %v843 = vpop.f32.mrb[0].mxu0
      %v844 = vadd.f32 0.0, %v843
      %v845 = vpop.f32.mrb[0].mxu0
      %846 = vmatprep.mubr.bf16.mxu0 0
      %847 = vmatmul.mubr.bf16.gmra.mrb[0].mxu0 %v634
      %v848 = vpop.f32.mrb[0].mxu0
      %v849 = vadd.f32 0.0, %v848
      %v850 = vpop.f32.mrb[0].mxu0
      %v851 = vpop.f32.mrb[0].mxu0
      %v852 = vadd.f32 0.0, %v851
      %v853 = vpop.f32.mrb[0].mxu0
      %854 = vmatprep.mubr.bf16.mxu0 0
      %855 = vmatmul.mubr.bf16.gmra.mrb[0].mxu0 %v637
      %v856 = vpop.f32.mrb[0].mxu0
      %v857 = vadd.f32 0.0, %v856
      %v858 = vpop.f32.mrb[0].mxu0
      %v859 = vpop.f32.mrb[0].mxu0
      %v860 = vadd.f32 0.0, %v859
      %v861 = vpop.f32.mrb[0].mxu0
      %862 = vmatprep.mubr.bf16.mxu0 0
      %863 = vmatmul.mubr.bf16.gmra.mrb[0].mxu0 %v640
      %v864 = vpop.f32.mrb[0].mxu0
      %v865 = vadd.f32 0.0, %v864
      %v866 = vpop.f32.mrb[0].mxu0
      %v867 = vpop.f32.mrb[0].mxu0
      %v868 = vadd.f32 0.0, %v867
      %v869 = vpop.f32.mrb[0].mxu0
      %870 = vmatprep.mubr.bf16.mxu0 0
      %871 = vmatmul.mubr.bf16.gmra.mrb[0].mxu0 %v643
      %v872 = vpop.f32.mrb[0].mxu0
      %v873 = vadd.f32 0.0, %v872
      %v874 = vpop.f32.mrb[0].mxu0
      %v875 = vpop.f32.mrb[0].mxu0
      %v876 = vadd.f32 0.0, %v875
      %v877 = vpop.f32.mrb[0].mxu0
      %878 = vmatprep.mubr.bf16.mxu0 0
      %879 = vmatmul.mubr.bf16.gmra.mrb[0].mxu0 %v646
      %v880 = vpop.f32.mrb[0].mxu0
      %v881 = vadd.f32 0.0, %v880
      %v882 = vpop.f32.mrb[0].mxu0
      %v883 = vpop.f32.mrb[0].mxu0
      %v884 = vadd.f32 0.0, %v883
      %v885 = vpop.f32.mrb[0].mxu0
      %886 = vmatprep.mubr.bf16.mxu0 0
      %887 = vmatmul.mubr.bf16.gmra.mrb[0].mxu0 %v649
      %v888 = vpop.f32.mrb[0].mxu0
      %v889 = vadd.f32 0.0, %v888
      %v890 = vpop.f32.mrb[0].mxu0
      %v891 = vpop.f32.mrb[0].mxu0
      %v892 = vadd.f32 0.0, %v891
      %v893 = vpop.f32.mrb[0].mxu0
      %894 = vmatprep.mubr.bf16.mxu0 0
      %895 = vmatmul.mubr.bf16.gmra.mrb[0].mxu0 %v652
      %v896 = vpop.f32.mrb[0].mxu0
      %v897 = vadd.f32 0.0, %v896
      %v898 = vpop.f32.mrb[0].mxu0
      %v899 = vpop.f32.mrb[0].mxu0
      %v900 = vadd.f32 0.0, %v899
      %v901 = vpop.f32.mrb[0].mxu0
      %902 = vmatprep.mubr.bf16.mxu0 0
      %903 = vmatmul.mubr.bf16.gmra.mrb[0].mxu0 %v655
      %v904 = vpop.f32.mrb[0].mxu0
      %v905 = vadd.f32 0.0, %v904
      %v906 = vpop.f32.mrb[0].mxu0
      %v907 = vpop.f32.mrb[0].mxu0
      %v908 = vadd.f32 0.0, %v907
      %v909 = vpop.f32.mrb[0].mxu0
      %910 = vmatprep.mubr.bf16.mxu0 0
      %911 = vmatmul.mubr.bf16.gmra.mrb[0].mxu0 %v658
      %v912 = vpop.f32.mrb[0].mxu0
      %v913 = vadd.f32 0.0, %v912
      %v914 = vpop.f32.mrb[0].mxu0
      %v915 = vpop.f32.mrb[0].mxu0
      %v916 = vadd.f32 0.0, %v915
      %v917 = vpop.f32.mrb[0].mxu0
      %918 = vmatprep.mubr.bf16.mxu0 0
      %919 = vmatmul.mubr.bf16.gmra.mrb[0].mxu0 %v661
      %v920 = vpop.f32.mrb[0].mxu0
      %v921 = vadd.f32 0.0, %v920
      %v922 = vpop.f32.mrb[0].mxu0
      %v923 = vpop.f32.mrb[0].mxu0
      %v924 = vadd.f32 0.0, %v923
      %v925 = vpop.f32.mrb[0].mxu0
      %926 = vmatprep.mubr.bf16.mxu0 0
      %927 = vmatmul.mubr.bf16.gmra.mrb[0].mxu0 %v664
      %v928 = vpop.f32.mrb[0].mxu0
      %v929 = vadd.f32 0.0, %v928
      %v930 = vpop.f32.mrb[0].mxu0
      %v931 = vpop.f32.mrb[0].mxu0
      %v932 = vadd.f32 0.0, %v931
      %v933 = vpop.f32.mrb[0].mxu0
      %934 = vmatprep.mubr.bf16.mxu0 0
      %935 = vmatmul.mubr.bf16.gmra.mrb[0].mxu0 %v667
      %v936 = vpop.f32.mrb[0].mxu0
      %v937 = vadd.f32 0.0, %v936
      %v938 = vpop.f32.mrb[0].mxu0
      %v939 = vpop.f32.mrb[0].mxu0
      %v940 = vadd.f32 0.0, %v939
      %v941 = vpop.f32.mrb[0].mxu0
      %942 = vmatprep.mubr.bf16.mxu0 0
      %943 = vmatmul.mubr.bf16.gmra.mrb[0].mxu0 %v670
      %v944 = vpop.f32.mrb[0].mxu0
      %v945 = vadd.f32 0.0, %v944
      %v946 = vpop.f32.mrb[0].mxu0
      %v947 = vpop.f32.mrb[0].mxu0
      %v948 = vadd.f32 0.0, %v947
      %v949 = vpop.f32.mrb[0].mxu0
      %950 = vmatprep.mubr.bf16.mxu0 0
      %951 = vmatmul.mubr.bf16.gmra.mrb[0].mxu0 %v673
      %v952 = vpop.f32.mrb[0].mxu0
      %v953 = vadd.f32 0.0, %v952
      %v954 = vpop.f32.mrb[0].mxu0
      %v955 = vpop.f32.mrb[0].mxu0
      %v956 = vadd.f32 0.0, %v955
      %v957 = vpop.f32.mrb[0].mxu0
      %958 = vmatprep.mubr.bf16.mxu0 0
      %959 = vmatmul.mubr.bf16.gmra.mrb[0].mxu0 %v676
      %v960 = vpop.f32.mrb[0].mxu0
      %v961 = vadd.f32 0.0, %v960
      %v962 = vpop.f32.mrb[0].mxu0
      %v963 = vpop.f32.mrb[0].mxu0
      %v964 = vadd.f32 0.0, %v963
      %v965 = vpop.f32.mrb[0].mxu0
      %966 = vdwg.mxu0
      %v967 = vld [vmem:[%s287] sm:$0x1]
      %v969 = vlaneseq
      %v970 = vshrl.u32 %v969, 7
      %v971 = vsub.s32 0, %v970
      %v972 = vrot.slane %v967, %v971
      %v974 = vmul.f32 %v713, %v972
      %v975 = vmul.f32 %v716, %v972
      %v976 = vmul.f32 %v721, %v972
      %v977 = vmul.f32 %v724, %v972
      %v978 = vmul.f32 %v729, %v972
      %v979 = vmul.f32 %v732, %v972
      %v980 = vmul.f32 %v737, %v972
      %v981 = vmul.f32 %v740, %v972
      %v982 = vmul.f32 %v745, %v972
      %v983 = vmul.f32 %v748, %v972
      %v984 = vmul.f32 %v753, %v972
      %v985 = vmul.f32 %v756, %v972
      %v986 = vmul.f32 %v761, %v972
      %v987 = vmul.f32 %v764, %v972
      %v988 = vmul.f32 %v769, %v972
      %v989 = vmul.f32 %v772, %v972
      %v990 = vmul.f32 %v777, %v972
      %v991 = vmul.f32 %v780, %v972
      %v992 = vmul.f32 %v785, %v972
      %v993 = vmul.f32 %v788, %v972
      %v994 = vmul.f32 %v793, %v972
      %v995 = vmul.f32 %v796, %v972
      %v996 = vmul.f32 %v801, %v972
      %v997 = vmul.f32 %v804, %v972
      %v998 = vmul.f32 %v809, %v972
      %v999 = vmul.f32 %v812, %v972
      %v1000 = vmul.f32 %v817, %v972
      %v1001 = vmul.f32 %v820, %v972
      %v1002 = vmul.f32 %v825, %v972
      %v1003 = vmul.f32 %v828, %v972
      %v1004 = vmul.f32 %v833, %v972
      %v1005 = vmul.f32 %v836, %v972
      %v1006 = vmul.f32 %v841, %v972
      %v1007 = vmul.f32 %v844, %v972
      %v1008 = vmul.f32 %v849, %v972
      %v1009 = vmul.f32 %v852, %v972
      %v1010 = vmul.f32 %v857, %v972
      %v1011 = vmul.f32 %v860, %v972
      %v1012 = vmul.f32 %v865, %v972
      %v1013 = vmul.f32 %v868, %v972
      %v1014 = vmul.f32 %v873, %v972
      %v1015 = vmul.f32 %v876, %v972
      %v1016 = vmul.f32 %v881, %v972
      %v1017 = vmul.f32 %v884, %v972
      %v1018 = vmul.f32 %v889, %v972
      %v1019 = vmul.f32 %v892, %v972
      %v1020 = vmul.f32 %v897, %v972
      %v1021 = vmul.f32 %v900, %v972
      %v1022 = vmul.f32 %v905, %v972
      %v1023 = vmul.f32 %v908, %v972
      %v1024 = vmul.f32 %v913, %v972
      %v1025 = vmul.f32 %v916, %v972
      %v1026 = vmul.f32 %v921, %v972
      %v1027 = vmul.f32 %v924, %v972
      %v1028 = vmul.f32 %v929, %v972
      %v1029 = vmul.f32 %v932, %v972
      %v1030 = vmul.f32 %v937, %v972
      %v1031 = vmul.f32 %v940, %v972
      %v1032 = vmul.f32 %v945, %v972
      %v1033 = vmul.f32 %v948, %v972
      %v1034 = vmul.f32 %v953, %v972
      %v1035 = vmul.f32 %v956, %v972
      %v1036 = vmul.f32 %v961, %v972
      %v1037 = vmul.f32 %v964, %v972
      %v1038 = vld [vmem:[%s290] sm:$0x1]
      %v1040 = vlaneseq
      %v1041 = vshrl.u32 %v1040, 7
      %v1042 = vsub.s32 0, %v1041
      %v1043 = vrot.slane %v1038, %v1042
      %v1045 = vadd.f32 %v974, %v1043
      %v1046 = vadd.f32 %v975, %v1043
      %v1047 = vadd.f32 %v976, %v1043
      %v1048 = vadd.f32 %v977, %v1043
      %v1049 = vadd.f32 %v978, %v1043
      %v1050 = vadd.f32 %v979, %v1043
      %v1051 = vadd.f32 %v980, %v1043
      %v1052 = vadd.f32 %v981, %v1043
      %v1053 = vadd.f32 %v982, %v1043
      %v1054 = vadd.f32 %v983, %v1043
      %v1055 = vadd.f32 %v984, %v1043
      %v1056 = vadd.f32 %v985, %v1043
      %v1057 = vadd.f32 %v986, %v1043
      %v1058 = vadd.f32 %v987, %v1043
      %v1059 = vadd.f32 %v988, %v1043
      %v1060 = vadd.f32 %v989, %v1043
      %v1061 = vadd.f32 %v990, %v1043
      %v1062 = vadd.f32 %v991, %v1043
      %v1063 = vadd.f32 %v992, %v1043
      %v1064 = vadd.f32 %v993, %v1043
      %v1065 = vadd.f32 %v994, %v1043
      %v1066 = vadd.f32 %v995, %v1043
      %v1067 = vadd.f32 %v996, %v1043
      %v1068 = vadd.f32 %v997, %v1043
      %v1069 = vadd.f32 %v998, %v1043
      %v1070 = vadd.f32 %v999, %v1043
      %v1071 = vadd.f32 %v1000, %v1043
      %v1072 = vadd.f32 %v1001, %v1043
      %v1073 = vadd.f32 %v1002, %v1043
      %v1074 = vadd.f32 %v1003, %v1043
      %v1075 = vadd.f32 %v1004, %v1043
      %v1076 = vadd.f32 %v1005, %v1043
      %v1077 = vadd.f32 %v1006, %v1043
      %v1078 = vadd.f32 %v1007, %v1043
      %v1079 = vadd.f32 %v1008, %v1043
      %v1080 = vadd.f32 %v1009, %v1043
      %v1081 = vadd.f32 %v1010, %v1043
      %v1082 = vadd.f32 %v1011, %v1043
      %v1083 = vadd.f32 %v1012, %v1043
      %v1084 = vadd.f32 %v1013, %v1043
      %v1085 = vadd.f32 %v1014, %v1043
      %v1086 = vadd.f32 %v1015, %v1043
      %v1087 = vadd.f32 %v1016, %v1043
      %v1088 = vadd.f32 %v1017, %v1043
      %v1089 = vadd.f32 %v1018, %v1043
      %v1090 = vadd.f32 %v1019, %v1043
      %v1091 = vadd.f32 %v1020, %v1043
      %v1092 = vadd.f32 %v1021, %v1043
      %v1093 = vadd.f32 %v1022, %v1043
      %v1094 = vadd.f32 %v1023, %v1043
      %v1095 = vadd.f32 %v1024, %v1043
      %v1096 = vadd.f32 %v1025, %v1043
      %v1097 = vadd.f32 %v1026, %v1043
      %v1098 = vadd.f32 %v1027, %v1043
      %v1099 = vadd.f32 %v1028, %v1043
      %v1100 = vadd.f32 %v1029, %v1043
      %v1101 = vadd.f32 %v1030, %v1043
      %v1102 = vadd.f32 %v1031, %v1043
      %v1103 = vadd.f32 %v1032, %v1043
      %v1104 = vadd.f32 %v1033, %v1043
      %v1105 = vadd.f32 %v1034, %v1043
      %v1106 = vadd.f32 %v1035, %v1043
      %v1107 = vadd.f32 %v1036, %v1043
      %v1108 = vadd.f32 %v1037, %v1043
      %vm1109 = vcmask 64512
      %1110 = vst.msk [vmem:[%s298] sm:$0xff] %vm1109, %v1045
      %1111 = vst.msk [vmem:[%s298 + $0x8] sm:$0xff] %vm1109, %v1046
      %1112 = vst.msk [vmem:[%s298 + $0x10] sm:$0xff] %vm1109, %v1047
      %1113 = vst.msk [vmem:[%s298 + $0x18] sm:$0xff] %vm1109, %v1048
      %1114 = vst.msk [vmem:[%s298 + $0x20] sm:$0xff] %vm1109, %v1049
      %1115 = vst.msk [vmem:[%s298 + $0x28] sm:$0xff] %vm1109, %v1050
      %1116 = vst.msk [vmem:[%s298 + $0x30] sm:$0xff] %vm1109, %v1051
      %1117 = vst.msk [vmem:[%s298 + $0x38] sm:$0xff] %vm1109, %v1052
      %1118 = vst.msk [vmem:[%s298 + $0x40] sm:$0xff] %vm1109, %v1053
      %1119 = vst.msk [vmem:[%s298 + $0x48] sm:$0xff] %vm1109, %v1054
      %1120 = vst.msk [vmem:[%s298 + $0x50] sm:$0xff] %vm1109, %v1055
      %1121 = vst.msk [vmem:[%s298 + $0x58] sm:$0xff] %vm1109, %v1056
      %1122 = vst.msk [vmem:[%s298 + $0x60] sm:$0xff] %vm1109, %v1057
      %1123 = vst.msk [vmem:[%s298 + $0x68] sm:$0xff] %vm1109, %v1058
      %1124 = vst.msk [vmem:[%s298 + $0x70] sm:$0xff] %vm1109, %v1059
      %1125 = vst.msk [vmem:[%s298 + $0x78] sm:$0xff] %vm1109, %v1060
      %1126 = vst.msk [vmem:[%s298 + $0x80] sm:$0xff] %vm1109, %v1061
      %1127 = vst.msk [vmem:[%s298 + $0x88] sm:$0xff] %vm1109, %v1062
      %1128 = vst.msk [vmem:[%s298 + $0x90] sm:$0xff] %vm1109, %v1063
      %1129 = vst.msk [vmem:[%s298 + $0x98] sm:$0xff] %vm1109, %v1064
      %1130 = vst.msk [vmem:[%s298 + $0xa0] sm:$0xff] %vm1109, %v1065
      %1131 = vst.msk [vmem:[%s298 + $0xa8] sm:$0xff] %vm1109, %v1066
      %1132 = vst.msk [vmem:[%s298 + $0xb0] sm:$0xff] %vm1109, %v1067
      %1133 = vst.msk [vmem:[%s298 + $0xb8] sm:$0xff] %vm1109, %v1068
      %1134 = vst.msk [vmem:[%s298 + $0xc0] sm:$0xff] %vm1109, %v1069
      %1135 = vst.msk [vmem:[%s298 + $0xc8] sm:$0xff] %vm1109, %v1070
      %1136 = vst.msk [vmem:[%s298 + $0xd0] sm:$0xff] %vm1109, %v1071
      %1137 = vst.msk [vmem:[%s298 + $0xd8] sm:$0xff] %vm1109, %v1072
      %1138 = vst.msk [vmem:[%s298 + $0xe0] sm:$0xff] %vm1109, %v1073
      %1139 = vst.msk [vmem:[%s298 + $0xe8] sm:$0xff] %vm1109, %v1074
      %1140 = vst.msk [vmem:[%s298 + $0xf0] sm:$0xff] %vm1109, %v1075
      %1141 = vst.msk [vmem:[%s298 + $0xf8] sm:$0xff] %vm1109, %v1076
      %1142 = vst.msk [vmem:[%s298 + $0x100] sm:$0xff] %vm1109, %v1077
      %1143 = vst.msk [vmem:[%s298 + $0x108] sm:$0xff] %vm1109, %v1078
      %1144 = vst.msk [vmem:[%s298 + $0x110] sm:$0xff] %vm1109, %v1079
      %1145 = vst.msk [vmem:[%s298 + $0x118] sm:$0xff] %vm1109, %v1080
      %1146 = vst.msk [vmem:[%s298 + $0x120] sm:$0xff] %vm1109, %v1081
      %1147 = vst.msk [vmem:[%s298 + $0x128] sm:$0xff] %vm1109, %v1082
      %1148 = vst.msk [vmem:[%s298 + $0x130] sm:$0xff] %vm1109, %v1083
      %1149 = vst.msk [vmem:[%s298 + $0x138] sm:$0xff] %vm1109, %v1084
      %1150 = vst.msk [vmem:[%s298 + $0x140] sm:$0xff] %vm1109, %v1085
      %1151 = vst.msk [vmem:[%s298 + $0x148] sm:$0xff] %vm1109, %v1086
      %1152 = vst.msk [vmem:[%s298 + $0x150] sm:$0xff] %vm1109, %v1087
      %1153 = vst.msk [vmem:[%s298 + $0x158] sm:$0xff] %vm1109, %v1088
      %1154 = vst.msk [vmem:[%s298 + $0x160] sm:$0xff] %vm1109, %v1089
      %1155 = vst.msk [vmem:[%s298 + $0x168] sm:$0xff] %vm1109, %v1090
      %1156 = vst.msk [vmem:[%s298 + $0x170] sm:$0xff] %vm1109, %v1091
      %1157 = vst.msk [vmem:[%s298 + $0x178] sm:$0xff] %vm1109, %v1092
      %1158 = vst.msk [vmem:[%s298 + $0x180] sm:$0xff] %vm1109, %v1093
      %1159 = vst.msk [vmem:[%s298 + $0x188] sm:$0xff] %vm1109, %v1094
      %1160 = vst.msk [vmem:[%s298 + $0x190] sm:$0xff] %vm1109, %v1095
      %1161 = vst.msk [vmem:[%s298 + $0x198] sm:$0xff] %vm1109, %v1096
      %1162 = vst.msk [vmem:[%s298 + $0x1a0] sm:$0xff] %vm1109, %v1097
      %1163 = vst.msk [vmem:[%s298 + $0x1a8] sm:$0xff] %vm1109, %v1098
      %1164 = vst.msk [vmem:[%s298 + $0x1b0] sm:$0xff] %vm1109, %v1099
      %1165 = vst.msk [vmem:[%s298 + $0x1b8] sm:$0xff] %vm1109, %v1100
      %1166 = vst.msk [vmem:[%s298 + $0x1c0] sm:$0xff] %vm1109, %v1101
      %1167 = vst.msk [vmem:[%s298 + $0x1c8] sm:$0xff] %vm1109, %v1102
      %1168 = vst.msk [vmem:[%s298 + $0x1d0] sm:$0xff] %vm1109, %v1103
      %1169 = vst.msk [vmem:[%s298 + $0x1d8] sm:$0xff] %vm1109, %v1104
      %1170 = vst.msk [vmem:[%s298 + $0x1e0] sm:$0xff] %vm1109, %v1105
      %1171 = vst.msk [vmem:[%s298 + $0x1e8] sm:$0xff] %vm1109, %v1106
      %1172 = vst.msk [vmem:[%s298 + $0x1f0] sm:$0xff] %vm1109, %v1107
      %1173 = vst.msk [vmem:[%s298 + $0x1f8] sm:$0xff] %vm1109, %v1108
      %s1174 = smul.u32 64, %s20
      %p1175 = scmp.lt.s32.totalorder %s1174, 511
      %s1176 = scalar_select %p1175, %s1174, 511
      %p1177 = scmp.lt.s32.totalorder %s21, 0
      %s1178 = scalar_select %p1177, %s21, 0
      %s1179 = sadd.s32 %s1178, %s1176
      %s1180 = smul.addr %s1179, 8
      %s1181 = scalar_lea.vmem %s4, %s1180
      // Predicated region
      $region37: #{_conv_fwd.1} parent=35 // pred_check
        %p1182 = pneg %p162
      $region38: #{_conv_fwd.1} parent=35 // pred_check_branch
        %1184 = sbr.rel (%p1182) target = $region40
      $region39: #{_conv_fwd.1} parent=35 // pred_region
        %s1185 = smul.u32 64, %s20
      $region40: #{_conv_fwd.1} parent=35 // pred_fallthru
        _
    $region36: #{_conv_fwd.1} parent=5 // pred_fallthru
      _
    %p1186 = scmp.le.s32.totalorder 2, %s10
    // Predicated region
    $region41: #{_conv_fwd.1} parent=5 // pred_check
      %p1187 = pneg %p1186
    $region42: #{_conv_fwd.1} parent=5 // pred_check_branch
      %1189 = sbr.rel (%p1187) target = $region44
    $region43: #{_conv_fwd.1} parent=5 // pred_region
      %s1190 = ssub.s32 %s10, 2
      // Predicated region
      $region45: #{_conv_fwd.1} parent=43 // pred_check
        %p1191 = pneg %p168
      $region46: #{_conv_fwd.1} parent=43 // pred_check_branch
        %1193 = sbr.rel (%p1191) target = $region48
      $region47: #{_conv_fwd.1} parent=43 // pred_region
        %s1194 = smul.u32 64, %s23
        %p1195 = scmp.lt.s32.totalorder %s1194, 511
        %s1196 = scalar_select %p1195, %s1194, 511
        %p1197 = scmp.lt.s32.totalorder %s24, 0
        %s1198 = scalar_select %p1197, %s24, 0
        %s1199 = sadd.s32 %s1198, %s1196
        %s1200 = smul.addr %s1199, 8
        %s1201 = scalar_lea.vmem %s4, %s1200
      $region48: #{_conv_fwd.1} parent=43 // pred_fallthru
        _
    $region44: #{_conv_fwd.1} parent=5 // pred_fallthru
      _
  $region6: #{_conv_fwd.1} parent=0 // loop_footer
    %s14 = sadd.s32 1, %s10
  $region7: #{_conv_fwd.1} parent=0 // loop_footer_branch
    %9 = sbr.rel target = $region3
  $region8: #{_conv_fwd.1} parent=0 // loop_exit
    _

</llo_original>
